<compile_context>
chip_gen: v6e
topology: v6e:2x2x1
jax: 0.10.0
libtpu: 0.0.40
codegen_flags: <defaults>
</compile_context>

<pallas_src>
import functools

import jax
import jax.numpy as jnp
from jax.experimental import pallas as pl
from jax.experimental.pallas import tpu as pltpu


# --------------------------------------------------------------------------------------
# Fused kernel: Q proj (once per batch row) + K/V proj + masked softmax + context + O proj
# --------------------------------------------------------------------------------------
def _mga_kernel(h_ref, kv_ref, mask_ref, wq_ref, wk_ref, wv_ref, wo_ref,
                out_ref, q_scratch, *, heads, scale):
    # h_ref:     (1, Lq, dim)
    # kv_ref:    (1, 1, Lkv, dim_kv)
    # mask_ref:  (1, 1, 1, Lkv)        (1.0 = attend, 0.0 = masked)
    # wq_ref:    (inner, dim)          wk_ref/wv_ref: (inner, dim_kv)   wo_ref: (dim, inner)
    # out_ref:   (1, 1, Lq, dim)
    # q_scratch: (Lq, inner) f32       persists across the graph grid axis
    g = pl.program_id(1)

    # ---- Q projection, computed once per batch row and reused for every graph ----
    @pl.when(g == 0)
    def _():
        h = h_ref[0].astype(jnp.float32)                     # (Lq, dim)
        wq = wq_ref[...].astype(jnp.float32)                 # (inner, dim)
        q_scratch[...] = jnp.dot(h, wq.T,
                                 preferred_element_type=jnp.float32) * scale

    q = q_scratch[...]                                       # (Lq, inner) f32, pre-scaled
    kv = kv_ref[0, 0].astype(jnp.float32)                    # (Lkv, dim_kv)
    wk = wk_ref[...].astype(jnp.float32)
    wv = wv_ref[...].astype(jnp.float32)
    wo = wo_ref[...].astype(jnp.float32)                     # (dim, inner)
    mask = mask_ref[0, 0].astype(jnp.float32)                # (1, Lkv)

    # ---- K / V projections (MXU, f32 accumulation) ----
    k = jnp.dot(kv, wk.T, preferred_element_type=jnp.float32)   # (Lkv, inner)
    v = jnp.dot(kv, wv.T, preferred_element_type=jnp.float32)   # (Lkv, inner)

    inner = q.shape[-1]
    dph = inner // heads
    add_mask = (1.0 - mask) * jnp.finfo(jnp.float32).min        # (1, Lkv), extend_mask()

    # ---- Per-head attention (static unrolled loop; avoids batched-dot reshapes) ----
    ctx_heads = []
    for h in range(heads):
        sl = slice(h * dph, (h + 1) * dph)
        qh = q[:, sl]                                            # (Lq,  dph)
        kh = k[:, sl]                                            # (Lkv, dph)
        vh = v[:, sl]                                            # (Lkv, dph)
        s = jnp.dot(qh, kh.T, preferred_element_type=jnp.float32)  # (Lq, Lkv)
        s = s + add_mask
        s = s - jnp.max(s, axis=-1, keepdims=True)
        p = jnp.exp(s)
        p = p * pl.reciprocal(jnp.sum(p, axis=-1, keepdims=True), approx=False)
        ctx_heads.append(jnp.dot(p, vh, preferred_element_type=jnp.float32))  # (Lq, dph)

    ctx = jnp.concatenate(ctx_heads, axis=-1)                    # (Lq, inner) == unshape()
    out = jnp.dot(ctx, wo.T, preferred_element_type=jnp.float32)  # (Lq, dim)  == self.o
    out_ref[0, 0] = out.astype(out_ref.dtype)


# --------------------------------------------------------------------------------------
# Wrapper (forward pass of MultiGraphAttentionWithConcat)
# --------------------------------------------------------------------------------------
def multi_graph_attention_with_concat(H, KV, wq, wk, wv, wo, KV_mask=None, *, heads):
    """H: (B, Lq, dim); KV: (B, G, Lkv, dim_kv); weights in torch nn.Linear layout (out, in).
    Returns (concatenated, None) where concatenated is (B, Lq, G * dim)."""
    B, Lq, dim = H.shape
    _, G, Lkv, dim_kv = KV.shape
    inner = wq.shape[0]
    assert inner % heads == 0
    dph = inner // heads
    scale = dph ** -0.5

    if KV_mask is None:
        KV_mask = jnp.ones((B, G, Lkv), dtype=jnp.float32)
    mask4 = KV_mask.astype(jnp.float32).reshape(B, G, 1, Lkv)

    out = pl.pallas_call(
        functools.partial(_mga_kernel, heads=heads, scale=scale),
        out_shape=jax.ShapeDtypeStruct((B, G, Lq, dim), H.dtype),
        grid_spec=pltpu.PrefetchScalarGridSpec(
            num_scalar_prefetch=0,
            grid=(B, G),
            in_specs=[
                pl.BlockSpec((1, Lq, dim), lambda b, g: (b, 0, 0)),          # H (resident over g)
                pl.BlockSpec((1, 1, Lkv, dim_kv), lambda b, g: (b, g, 0, 0)),
                pl.BlockSpec((1, 1, 1, Lkv), lambda b, g: (b, g, 0, 0)),
                pl.BlockSpec((inner, dim), lambda b, g: (0, 0)),             # Wq (resident)
                pl.BlockSpec((inner, dim_kv), lambda b, g: (0, 0)),          # Wk (resident)
                pl.BlockSpec((inner, dim_kv), lambda b, g: (0, 0)),          # Wv (resident)
                pl.BlockSpec((dim, inner), lambda b, g: (0, 0)),             # Wo (resident)
            ],
            out_specs=pl.BlockSpec((1, 1, Lq, dim), lambda b, g: (b, g, 0, 0)),
            scratch_shapes=[pltpu.VMEM((Lq, inner), jnp.float32)],           # Q carried over g
        ),
        compiler_params=pltpu.CompilerParams(
            dimension_semantics=("parallel", "arbitrary")),
    )(H, KV, mask4, wq, wk, wv, wo)

    # torch.cat(all_attn, dim=-1): (B, G, Lq, dim) -> (B, Lq, G*dim)
    concatenated = jnp.transpose(out, (0, 2, 1, 3)).reshape(B, Lq, G * dim)
    return concatenated, None


# --------------------------------------------------------------------------------------
# Pure-JAX reference (mirrors the PyTorch forward exactly)
# --------------------------------------------------------------------------------------
def _ref_forward(H, KV, KV_mask, wq, wk, wv, wo, heads):
    B, Lq, dim = H.shape
    _, G, Lkv, dim_kv = KV.shape
    inner = wq.shape[0]
    dph = inner // heads
    q = (H @ wq.T).reshape(B, Lq, heads, dph).transpose(0, 2, 1, 3) * dph ** -0.5
    outs = []
    for g in range(G):
        k = (KV[:, g] @ wk.T).reshape(B, Lkv, heads, dph).transpose(0, 2, 1, 3)
        v = (KV[:, g] @ wv.T).reshape(B, Lkv, heads, dph).transpose(0, 2, 1, 3)
        s = jnp.einsum('bhqd,bhkd->bhqk', q, k)
        if KV_mask is not None:
            add = (1.0 - KV_mask[:, g].astype(jnp.float32))[:, None, None, :] \
                  * jnp.finfo(jnp.float32).min
            s = s + add
        p = jax.nn.softmax(s.astype(jnp.float32), axis=-1).astype(s.dtype)
        ctx = jnp.einsum('bhqk,bhkd->bhqd', p, v).transpose(0, 2, 1, 3).reshape(B, Lq, inner)
        outs.append(ctx @ wo.T)
    return jnp.concatenate(outs, axis=-1)


# --------------------------------------------------------------------------------------
# Test
# --------------------------------------------------------------------------------------
if __name__ == "__main__":
    key = jax.random.PRNGKey(0)
    B, G, Lq, Lkv = 2, 2, 8, 8
    dim, dim_kv, heads = 32, 32, 4
    inner = (dim_kv // heads) * heads

    ks = jax.random.split(key, 7)
    H = jax.random.normal(ks[0], (B, Lq, dim), dtype=jnp.float32)
    KV = jax.random.normal(ks[1], (B, G, Lkv, dim_kv), dtype=jnp.float32)
    wq = jax.random.normal(ks[2], (inner, dim), dtype=jnp.float32) * 0.1
    wk = jax.random.normal(ks[3], (inner, dim_kv), dtype=jnp.float32) * 0.1
    wv = jax.random.normal(ks[4], (inner, dim_kv), dtype=jnp.float32) * 0.1
    wo = jax.random.normal(ks[5], (dim, inner), dtype=jnp.float32) * 0.1
    mask = (jax.random.uniform(ks[6], (B, G, Lkv)) > 0.3).astype(jnp.float32)
    mask = mask.at[:, :, 0].set(1.0)  # keep at least one valid key per row

    out, kv_cache = multi_graph_attention_with_concat(
        H, KV, wq, wk, wv, wo, KV_mask=mask, heads=heads)
    jax.block_until_ready(out)

    ref = _ref_forward(H, KV, mask, wq, wk, wv, wo, heads)
    assert out.shape == (B, Lq, G * dim), out.shape
    assert out.dtype == H.dtype
    max_err = float(jnp.max(jnp.abs(out - ref)))
    assert jnp.allclose(out, ref, atol=2e-4, rtol=2e-4), max_err

    print("KERNEL_OK")
</pallas_src>

<mosaic_0001>
module attributes {stable_mosaic.version = 11 : i64} {
  func.func @_mga_kernel(%arg0: i32, %arg1: i32, %arg2: memref<1x8x32xf32, #tpu.memory_space<vmem>>, %arg3: memref<1x1x8x32xf32, #tpu.memory_space<vmem>>, %arg4: memref<1x1x1x8xf32, #tpu.memory_space<vmem>>, %arg5: memref<32x32xf32, #tpu.memory_space<vmem>>, %arg6: memref<32x32xf32, #tpu.memory_space<vmem>>, %arg7: memref<32x32xf32, #tpu.memory_space<vmem>>, %arg8: memref<32x32xf32, #tpu.memory_space<vmem>>, %arg9: memref<1x1x8x32xf32, #tpu.memory_space<vmem>>, %arg10: memref<8x32xf32, #tpu.memory_space<vmem>>) attributes {dimension_semantics = [#tpu.dimension_semantics<parallel>, #tpu.dimension_semantics<arbitrary>], iteration_bounds = array<i64: 2, 2>, scalar_prefetch = 0 : i64, scratch_operands = 1 : i64, tpu.core_type = #tpu.core_type<tc>, window_params = [{transform_indices = @transform_0, window_bounds = array<i64: 1, 8, 32>}, {transform_indices = @transform_1, window_bounds = array<i64: 1, 1, 8, 32>}, {transform_indices = @transform_2, window_bounds = array<i64: 1, 1, 1, 8>}, {pipeline_mode = #tpu.pipeline_mode<synchronous>, transform_indices = @transform_3, window_bounds = array<i64: 32, 32>}, {pipeline_mode = #tpu.pipeline_mode<synchronous>, transform_indices = @transform_4, window_bounds = array<i64: 32, 32>}, {pipeline_mode = #tpu.pipeline_mode<synchronous>, transform_indices = @transform_5, window_bounds = array<i64: 32, 32>}, {pipeline_mode = #tpu.pipeline_mode<synchronous>, transform_indices = @transform_6, window_bounds = array<i64: 32, 32>}, {transform_indices = @transform_7, window_bounds = array<i64: 1, 1, 8, 32>}]} {
    %c0_i32 = arith.constant 0 : i32
    %0 = arith.cmpi eq, %arg1, %c0_i32 : i32
    %1 = arith.extui %0 : i1 to i32
    %c0_i32_0 = arith.constant 0 : i32
    %2 = arith.cmpi ne, %1, %c0_i32_0 : i32
    scf.if %2 {
      %c0_40 = arith.constant 0 : index
      %c0_41 = arith.constant 0 : index
      %c0_42 = arith.constant 0 : index
      %97 = vector.load %arg2[%c0_40, %c0_41, %c0_42] : memref<1x8x32xf32, #tpu.memory_space<vmem>>, vector<1x8x32xf32>
      %98 = vector.shape_cast %97 : vector<1x8x32xf32> to vector<8x32xf32>
      %c0_43 = arith.constant 0 : index
      %c0_44 = arith.constant 0 : index
      %99 = vector.load %arg5[%c0_43, %c0_44] : memref<32x32xf32, #tpu.memory_space<vmem>>, vector<32x32xf32>
      %100 = tpu.transpose %99, [1, 0] : vector<32x32xf32> -> vector<32x32xf32>
      %cst_45 = arith.constant dense<0.000000e+00> : vector<8x32xf32>
      %101 = tpu.matmul %98, %100, %cst_45 {dimension_numbers = #tpu.dot_dimension_numbers<[1], [0], [0], [1], [0, 0, 1, 1], [], []>} : vector<8x32xf32>, vector<32x32xf32>, vector<8x32xf32> -> vector<8x32xf32>
      %cst_46 = arith.constant 0.353553385 : f32
      %102 = vector.broadcast %cst_46 : f32 to vector<8x32xf32>
      %103 = arith.mulf %101, %102 : vector<8x32xf32>
      %c0_47 = arith.constant 0 : index
      %c0_48 = arith.constant 0 : index
      %104 = vector.load %arg10[%c0_47, %c0_48] : memref<8x32xf32, #tpu.memory_space<vmem>>, vector<8x32xf32>
      tpu.vector_store %arg10[%c0_47, %c0_48], %103 {strides = array<i32>} : memref<8x32xf32, #tpu.memory_space<vmem>>, vector<8x32xf32>,
    } else {
    }
    %c0 = arith.constant 0 : index
    %c0_1 = arith.constant 0 : index
    %3 = vector.load %arg10[%c0, %c0_1] : memref<8x32xf32, #tpu.memory_space<vmem>>, vector<8x32xf32>
    %c0_2 = arith.constant 0 : index
    %c0_3 = arith.constant 0 : index
    %c0_4 = arith.constant 0 : index
    %c0_5 = arith.constant 0 : index
    %4 = vector.load %arg3[%c0_2, %c0_3, %c0_4, %c0_5] : memref<1x1x8x32xf32, #tpu.memory_space<vmem>>, vector<1x1x8x32xf32>
    %5 = vector.shape_cast %4 : vector<1x1x8x32xf32> to vector<8x32xf32>
    %c0_6 = arith.constant 0 : index
    %c0_7 = arith.constant 0 : index
    %6 = vector.load %arg6[%c0_6, %c0_7] : memref<32x32xf32, #tpu.memory_space<vmem>>, vector<32x32xf32>
    %c0_8 = arith.constant 0 : index
    %c0_9 = arith.constant 0 : index
    %7 = vector.load %arg7[%c0_8, %c0_9] : memref<32x32xf32, #tpu.memory_space<vmem>>, vector<32x32xf32>
    %c0_10 = arith.constant 0 : index
    %c0_11 = arith.constant 0 : index
    %8 = vector.load %arg8[%c0_10, %c0_11] : memref<32x32xf32, #tpu.memory_space<vmem>>, vector<32x32xf32>
    %c0_12 = arith.constant 0 : index
    %c0_13 = arith.constant 0 : index
    %c0_14 = arith.constant 0 : index
    %c0_15 = arith.constant 0 : index
    %9 = vector.load %arg4[%c0_12, %c0_13, %c0_14, %c0_15] : memref<1x1x1x8xf32, #tpu.memory_space<vmem>>, vector<1x1x1x8xf32>
    %10 = vector.shape_cast %9 : vector<1x1x1x8xf32> to vector<1x8xf32>
    %11 = tpu.transpose %6, [1, 0] : vector<32x32xf32> -> vector<32x32xf32>
    %cst = arith.constant dense<0.000000e+00> : vector<8x32xf32>
    %12 = tpu.matmul %5, %11, %cst {dimension_numbers = #tpu.dot_dimension_numbers<[1], [0], [0], [1], [0, 0, 1, 1], [], []>} : vector<8x32xf32>, vector<32x32xf32>, vector<8x32xf32> -> vector<8x32xf32>
    %13 = tpu.transpose %7, [1, 0] : vector<32x32xf32> -> vector<32x32xf32>
    %cst_16 = arith.constant dense<0.000000e+00> : vector<8x32xf32>
    %14 = tpu.matmul %5, %13, %cst_16 {dimension_numbers = #tpu.dot_dimension_numbers<[1], [0], [0], [1], [0, 0, 1, 1], [], []>} : vector<8x32xf32>, vector<32x32xf32>, vector<8x32xf32> -> vector<8x32xf32>
    %cst_17 = arith.constant 1.000000e+00 : f32
    %15 = vector.broadcast %cst_17 : f32 to vector<1x8xf32>
    %16 = arith.subf %15, %10 : vector<1x8xf32>
    %cst_18 = arith.constant -3.40282347E+38 : f32
    %17 = vector.broadcast %cst_18 : f32 to vector<1x8xf32>
    %18 = arith.mulf %16, %17 : vector<1x8xf32>
    %19 = vector.extract_strided_slice %3 {offsets = [0, 0], sizes = [8, 8], strides = [1, 1]} : vector<8x32xf32> to vector<8x8xf32>
    %20 = vector.extract_strided_slice %12 {offsets = [0, 0], sizes = [8, 8], strides = [1, 1]} : vector<8x32xf32> to vector<8x8xf32>
    %21 = vector.extract_strided_slice %14 {offsets = [0, 0], sizes = [8, 8], strides = [1, 1]} : vector<8x32xf32> to vector<8x8xf32>
    %22 = tpu.transpose %20, [1, 0] : vector<8x8xf32> -> vector<8x8xf32>
    %cst_19 = arith.constant dense<0.000000e+00> : vector<8x8xf32>
    %23 = tpu.matmul %19, %22, %cst_19 {dimension_numbers = #tpu.dot_dimension_numbers<[1], [0], [0], [1], [0, 0, 1, 1], [], []>} : vector<8x8xf32>, vector<8x8xf32>, vector<8x8xf32> -> vector<8x8xf32>
    %24 = vector.broadcast %18 : vector<1x8xf32> to vector<8x8xf32>
    %25 = arith.addf %23, %24 : vector<8x8xf32>
    %cst_20 = arith.constant dense<0xFF800000> : vector<8xf32>
    %26 = vector.multi_reduction <maximumf>, %25, %cst_20 [1] : vector<8x8xf32> to vector<8xf32>
    %27 = vector.shape_cast %26 : vector<8xf32> to vector<8x1xf32>
    %28 = vector.broadcast %27 : vector<8x1xf32> to vector<8x8xf32>
    %29 = arith.subf %25, %28 : vector<8x8xf32>
    %30 = math.exp %29 : vector<8x8xf32>
    %cst_21 = arith.constant dense<0.000000e+00> : vector<8xf32>
    %31 = vector.multi_reduction <add>, %30, %cst_21 [1] : vector<8x8xf32> to vector<8xf32>
    %32 = vector.shape_cast %31 : vector<8xf32> to vector<8x1xf32>
    %33 = tpu.reciprocal %32 : vector<8x1xf32> -> vector<8x1xf32>
    %34 = vector.broadcast %33 : vector<8x1xf32> to vector<8x8xf32>
    %35 = arith.mulf %30, %34 : vector<8x8xf32>
    %cst_22 = arith.constant dense<0.000000e+00> : vector<8x8xf32>
    %36 = tpu.matmul %35, %21, %cst_22 {dimension_numbers = #tpu.dot_dimension_numbers<[1], [0], [0], [1], [0, 0, 1, 1], [], []>} : vector<8x8xf32>, vector<8x8xf32>, vector<8x8xf32> -> vector<8x8xf32>
    %37 = vector.extract_strided_slice %3 {offsets = [0, 8], sizes = [8, 8], strides = [1, 1]} : vector<8x32xf32> to vector<8x8xf32>
    %38 = vector.extract_strided_slice %12 {offsets = [0, 8], sizes = [8, 8], strides = [1, 1]} : vector<8x32xf32> to vector<8x8xf32>
    %39 = vector.extract_strided_slice %14 {offsets = [0, 8], sizes = [8, 8], strides = [1, 1]} : vector<8x32xf32> to vector<8x8xf32>
    %40 = tpu.transpose %38, [1, 0] : vector<8x8xf32> -> vector<8x8xf32>
    %cst_23 = arith.constant dense<0.000000e+00> : vector<8x8xf32>
    %41 = tpu.matmul %37, %40, %cst_23 {dimension_numbers = #tpu.dot_dimension_numbers<[1], [0], [0], [1], [0, 0, 1, 1], [], []>} : vector<8x8xf32>, vector<8x8xf32>, vector<8x8xf32> -> vector<8x8xf32>
    %42 = vector.broadcast %18 : vector<1x8xf32> to vector<8x8xf32>
    %43 = arith.addf %41, %42 : vector<8x8xf32>
    %cst_24 = arith.constant dense<0xFF800000> : vector<8xf32>
    %44 = vector.multi_reduction <maximumf>, %43, %cst_24 [1] : vector<8x8xf32> to vector<8xf32>
    %45 = vector.shape_cast %44 : vector<8xf32> to vector<8x1xf32>
    %46 = vector.broadcast %45 : vector<8x1xf32> to vector<8x8xf32>
    %47 = arith.subf %43, %46 : vector<8x8xf32>
    %48 = math.exp %47 : vector<8x8xf32>
    %cst_25 = arith.constant dense<0.000000e+00> : vector<8xf32>
    %49 = vector.multi_reduction <add>, %48, %cst_25 [1] : vector<8x8xf32> to vector<8xf32>
    %50 = vector.shape_cast %49 : vector<8xf32> to vector<8x1xf32>
    %51 = tpu.reciprocal %50 : vector<8x1xf32> -> vector<8x1xf32>
    %52 = vector.broadcast %51 : vector<8x1xf32> to vector<8x8xf32>
    %53 = arith.mulf %48, %52 : vector<8x8xf32>
    %cst_26 = arith.constant dense<0.000000e+00> : vector<8x8xf32>
    %54 = tpu.matmul %53, %39, %cst_26 {dimension_numbers = #tpu.dot_dimension_numbers<[1], [0], [0], [1], [0, 0, 1, 1], [], []>} : vector<8x8xf32>, vector<8x8xf32>, vector<8x8xf32> -> vector<8x8xf32>
    %55 = vector.extract_strided_slice %3 {offsets = [0, 16], sizes = [8, 8], strides = [1, 1]} : vector<8x32xf32> to vector<8x8xf32>
    %56 = vector.extract_strided_slice %12 {offsets = [0, 16], sizes = [8, 8], strides = [1, 1]} : vector<8x32xf32> to vector<8x8xf32>
    %57 = vector.extract_strided_slice %14 {offsets = [0, 16], sizes = [8, 8], strides = [1, 1]} : vector<8x32xf32> to vector<8x8xf32>
    %58 = tpu.transpose %56, [1, 0] : vector<8x8xf32> -> vector<8x8xf32>
    %cst_27 = arith.constant dense<0.000000e+00> : vector<8x8xf32>
    %59 = tpu.matmul %55, %58, %cst_27 {dimension_numbers = #tpu.dot_dimension_numbers<[1], [0], [0], [1], [0, 0, 1, 1], [], []>} : vector<8x8xf32>, vector<8x8xf32>, vector<8x8xf32> -> vector<8x8xf32>
    %60 = vector.broadcast %18 : vector<1x8xf32> to vector<8x8xf32>
    %61 = arith.addf %59, %60 : vector<8x8xf32>
    %cst_28 = arith.constant dense<0xFF800000> : vector<8xf32>
    %62 = vector.multi_reduction <maximumf>, %61, %cst_28 [1] : vector<8x8xf32> to vector<8xf32>
    %63 = vector.shape_cast %62 : vector<8xf32> to vector<8x1xf32>
    %64 = vector.broadcast %63 : vector<8x1xf32> to vector<8x8xf32>
    %65 = arith.subf %61, %64 : vector<8x8xf32>
    %66 = math.exp %65 : vector<8x8xf32>
    %cst_29 = arith.constant dense<0.000000e+00> : vector<8xf32>
    %67 = vector.multi_reduction <add>, %66, %cst_29 [1] : vector<8x8xf32> to vector<8xf32>
    %68 = vector.shape_cast %67 : vector<8xf32> to vector<8x1xf32>
    %69 = tpu.reciprocal %68 : vector<8x1xf32> -> vector<8x1xf32>
    %70 = vector.broadcast %69 : vector<8x1xf32> to vector<8x8xf32>
    %71 = arith.mulf %66, %70 : vector<8x8xf32>
    %cst_30 = arith.constant dense<0.000000e+00> : vector<8x8xf32>
    %72 = tpu.matmul %71, %57, %cst_30 {dimension_numbers = #tpu.dot_dimension_numbers<[1], [0], [0], [1], [0, 0, 1, 1], [], []>} : vector<8x8xf32>, vector<8x8xf32>, vector<8x8xf32> -> vector<8x8xf32>
    %73 = vector.extract_strided_slice %3 {offsets = [0, 24], sizes = [8, 8], strides = [1, 1]} : vector<8x32xf32> to vector<8x8xf32>
    %74 = vector.extract_strided_slice %12 {offsets = [0, 24], sizes = [8, 8], strides = [1, 1]} : vector<8x32xf32> to vector<8x8xf32>
    %75 = vector.extract_strided_slice %14 {offsets = [0, 24], sizes = [8, 8], strides = [1, 1]} : vector<8x32xf32> to vector<8x8xf32>
    %76 = tpu.transpose %74, [1, 0] : vector<8x8xf32> -> vector<8x8xf32>
    %cst_31 = arith.constant dense<0.000000e+00> : vector<8x8xf32>
    %77 = tpu.matmul %73, %76, %cst_31 {dimension_numbers = #tpu.dot_dimension_numbers<[1], [0], [0], [1], [0, 0, 1, 1], [], []>} : vector<8x8xf32>, vector<8x8xf32>, vector<8x8xf32> -> vector<8x8xf32>
    %78 = vector.broadcast %18 : vector<1x8xf32> to vector<8x8xf32>
    %79 = arith.addf %77, %78 : vector<8x8xf32>
    %cst_32 = arith.constant dense<0xFF800000> : vector<8xf32>
    %80 = vector.multi_reduction <maximumf>, %79, %cst_32 [1] : vector<8x8xf32> to vector<8xf32>
    %81 = vector.shape_cast %80 : vector<8xf32> to vector<8x1xf32>
    %82 = vector.broadcast %81 : vector<8x1xf32> to vector<8x8xf32>
    %83 = arith.subf %79, %82 : vector<8x8xf32>
    %84 = math.exp %83 : vector<8x8xf32>
    %cst_33 = arith.constant dense<0.000000e+00> : vector<8xf32>
    %85 = vector.multi_reduction <add>, %84, %cst_33 [1] : vector<8x8xf32> to vector<8xf32>
    %86 = vector.shape_cast %85 : vector<8xf32> to vector<8x1xf32>
    %87 = tpu.reciprocal %86 : vector<8x1xf32> -> vector<8x1xf32>
    %88 = vector.broadcast %87 : vector<8x1xf32> to vector<8x8xf32>
    %89 = arith.mulf %84, %88 : vector<8x8xf32>
    %cst_34 = arith.constant dense<0.000000e+00> : vector<8x8xf32>
    %90 = tpu.matmul %89, %75, %cst_34 {dimension_numbers = #tpu.dot_dimension_numbers<[1], [0], [0], [1], [0, 0, 1, 1], [], []>} : vector<8x8xf32>, vector<8x8xf32>, vector<8x8xf32> -> vector<8x8xf32>
    %91 = tpu.concatenate %36, %54, %72, %90 in 1 : vector<8x8xf32>, vector<8x8xf32>, vector<8x8xf32>, vector<8x8xf32> -> vector<8x32xf32>
    %92 = tpu.transpose %8, [1, 0] : vector<32x32xf32> -> vector<32x32xf32>
    %cst_35 = arith.constant dense<0.000000e+00> : vector<8x32xf32>
    %93 = tpu.matmul %91, %92, %cst_35 {dimension_numbers = #tpu.dot_dimension_numbers<[1], [0], [0], [1], [0, 0, 1, 1], [], []>} : vector<8x32xf32>, vector<32x32xf32>, vector<8x32xf32> -> vector<8x32xf32>
    %c0_36 = arith.constant 0 : index
    %c0_37 = arith.constant 0 : index
    %c0_38 = arith.constant 0 : index
    %c0_39 = arith.constant 0 : index
    %94 = vector.load %arg9[%c0_36, %c0_37, %c0_38, %c0_39] : memref<1x1x8x32xf32, #tpu.memory_space<vmem>>, vector<1x1x8x32xf32>
    %95 = vector.shape_cast %94 : vector<1x1x8x32xf32> to vector<8x32xf32>
    %96 = vector.shape_cast %93 : vector<8x32xf32> to vector<1x1x8x32xf32>
    tpu.vector_store %arg9[%c0_36, %c0_37, %c0_38, %c0_39], %96 {strides = array<i32>} : memref<1x1x8x32xf32, #tpu.memory_space<vmem>>, vector<1x1x8x32xf32>,
    return
  }
  func.func @transform_0(%arg0: i32, %arg1: i32) -> (i32, i32, i32) {
    %c0_i32 = arith.constant 0 : i32
    %c0_i32_0 = arith.constant 0 : i32
    %c0_i32_1 = arith.constant 0 : i32
    return %arg0, %c0_i32, %c0_i32_0 : i32, i32, i32
  }
  func.func @transform_1(%arg0: i32, %arg1: i32) -> (i32, i32, i32, i32) {
    %c0_i32 = arith.constant 0 : i32
    %c0_i32_0 = arith.constant 0 : i32
    %c0_i32_1 = arith.constant 0 : i32
    return %arg0, %arg1, %c0_i32, %c0_i32_0 : i32, i32, i32, i32
  }
  func.func @transform_2(%arg0: i32, %arg1: i32) -> (i32, i32, i32, i32) {
    %c0_i32 = arith.constant 0 : i32
    %c0_i32_0 = arith.constant 0 : i32
    %c0_i32_1 = arith.constant 0 : i32
    return %arg0, %arg1, %c0_i32, %c0_i32_0 : i32, i32, i32, i32
  }
  func.func @transform_3(%arg0: i32, %arg1: i32) -> (i32, i32) {
    %c0_i32 = arith.constant 0 : i32
    %c0_i32_0 = arith.constant 0 : i32
    %c0_i32_1 = arith.constant 0 : i32
    return %c0_i32, %c0_i32_0 : i32, i32
  }
  func.func @transform_4(%arg0: i32, %arg1: i32) -> (i32, i32) {
    %c0_i32 = arith.constant 0 : i32
    %c0_i32_0 = arith.constant 0 : i32
    %c0_i32_1 = arith.constant 0 : i32
    return %c0_i32, %c0_i32_0 : i32, i32
  }
  func.func @transform_5(%arg0: i32, %arg1: i32) -> (i32, i32) {
    %c0_i32 = arith.constant 0 : i32
    %c0_i32_0 = arith.constant 0 : i32
    %c0_i32_1 = arith.constant 0 : i32
    return %c0_i32, %c0_i32_0 : i32, i32
  }
  func.func @transform_6(%arg0: i32, %arg1: i32) -> (i32, i32) {
    %c0_i32 = arith.constant 0 : i32
    %c0_i32_0 = arith.constant 0 : i32
    %c0_i32_1 = arith.constant 0 : i32
    return %c0_i32, %c0_i32_0 : i32, i32
  }
  func.func @transform_7(%arg0: i32, %arg1: i32) -> (i32, i32, i32, i32) {
    %c0_i32 = arith.constant 0 : i32
    %c0_i32_0 = arith.constant 0 : i32
    %c0_i32_1 = arith.constant 0 : i32
    return %arg0, %arg1, %c0_i32, %c0_i32_0 : i32, i32, i32, i32
  }
}

</mosaic_0001>

<llo_original>
// kernel: tpu_custom_call.1
$region0: #{tpu_custom_call.1}
  #allocation0 [shape = 'u32[]', space=smem, size = 0x4, offset = 0x4, fixed_abs, tag = 'smem constant byte address 0x4 - core index']
  #allocation1 [shape = 'u32[144,128]{1,0:T(1,128)}', space=vmem, size = 0x12000, scoped, tag = 'internal scratch']
  #allocation2 [shape = 'f32[8,32]{1,0:T(8,128)}', space=vmem, size = 0x1000, scoped, tag = 'scratch operand']
  %s0 = inlined_call_operand.hbm [shape: f32[2,8,32], index: 0, kind: input, shape index: {}]
  %s1 = inlined_call_operand.hbm [shape: f32[2,2,8,32], index: 1, kind: input, shape index: {}]
  %s2 = inlined_call_operand.hbm [shape: f32[2,2,1,8], index: 2, kind: input, shape index: {}]
  %s3 = inlined_call_operand.hbm [shape: f32[32,32], index: 3, kind: input, shape index: {}]
  %s4 = inlined_call_operand.hbm [shape: f32[32,32], index: 4, kind: input, shape index: {}]
  %s5 = inlined_call_operand.hbm [shape: f32[32,32], index: 5, kind: input, shape index: {}]
  %s6 = inlined_call_operand.hbm [shape: f32[32,32], index: 6, kind: input, shape index: {}]
  %s7 = inlined_call_operand.hbm [shape: f32[2,2,8,32], index: 7, kind: output, shape index: {}]
  %s8 = sld [smem:[#allocation0]]
  $region93: #{tpu_custom_call.1} parent=0
    _
  %s10 = ssub.s32 1, %s8
  %s11 = scalar_select 0, %s10, %s8
  $region1: #{tpu_custom_call.1} parent=0
    #allocation3 [shape = 'u8[8192]{0}', space=vmem, size = 0x2000, scoped, tag = 'input window, operand 0']
    #allocation4 [shape = 's32[2]{0}', space=sflag, size = 0x8, scoped, tag = 'scoped memory for tpu_custom_call.1']
    #allocation5 [shape = 's32[2]{0}', space=sflag, size = 0x8, scoped, tag = 'scoped memory for tpu_custom_call.1']
    #allocation6 [shape = 'u8[8192]{0}', space=vmem, size = 0x2000, scoped, tag = 'input window, operand 1']
    #allocation7 [shape = 's32[2]{0}', space=sflag, size = 0x8, scoped, tag = 'scoped memory for tpu_custom_call.1']
    #allocation8 [shape = 'u8[1024]{0}', space=vmem, size = 0x400, scoped, tag = 'input window, operand 2']
    #allocation9 [shape = 'u8[16384]{0}', space=vmem, size = 0x4000, scoped, tag = 'input window, operand 3, single buffered']
    #allocation10 [shape = 's32[1]{0}', space=sflag, size = 0x4, scoped, tag = 'scoped memory for tpu_custom_call.1']
    #allocation11 [shape = 'u8[16384]{0}', space=vmem, size = 0x4000, scoped, tag = 'input window, operand 4, single buffered']
    #allocation12 [shape = 'u8[16384]{0}', space=vmem, size = 0x4000, scoped, tag = 'input window, operand 5, single buffered']
    #allocation13 [shape = 's32[1]{0}', space=sflag, size = 0x4, scoped, tag = 'scoped memory for tpu_custom_call.1']
    #allocation14 [shape = 'u8[16384]{0}', space=vmem, size = 0x4000, scoped, tag = 'input window, operand 6, single buffered']
    #allocation15 [shape = 'u8[8192]{0}', space=vmem, size = 0x2000, scoped, tag = 'output window, operand 0']
    %12 = vsyncpa [#allocation4], 0
    %s13 = scalar_lea.sflag [#allocation4], 1
    %14 = vsyncpa %s13, 0
    %15 = vsyncpa [#allocation7], 0
    %s16 = scalar_lea.sflag [#allocation7], 1
    %17 = vsyncpa %s16, 0
    %18 = vsyncpa [#allocation10], 0
    %19 = vsyncpa [#allocation13], 0
    %20 = vsyncpa [#allocation5], 0
    %s21 = scalar_lea.sflag [#allocation5], 1
    %22 = vsyncpa %s21, 0
    loop: start=0, step=1, limit=6
    $region2: #{tpu_custom_call.1} parent=1 // loop_pre_header
      _
    $region3: #{tpu_custom_call.1} parent=1 // loop_header
      %s24 = sphi 0, %s28
      %p25 = scmp.ge.s32.totalorder %s24, 6
      %s31 = sphi 0, %s43
      %s32 = sphi 0, %s39
      %s33 = sphi 0, %s31
      %s34 = sphi 0, %s32
      %s35 = sphi 0, %s33
      %s36 = sphi 0, %s34
      %s46 = sphi 0, %s48
      %s49 = sphi 0, %s46
      %s50 = sphi 0, %s49
      %s66 = sphi 0, %s50
      %s74 = sphi 0, %s76
      %s77 = sphi 0, %s74
      %s78 = sphi 0, %s77
      %s94 = sphi 0, %s78
      %s102 = sphi 0, %s104
      %s105 = sphi 0, %s102
      %s106 = sphi 0, %s105
      %s122 = sphi 0, %s106
      %s126 = sphi 0, %s126
      %s128 = sphi 0, %s126
      %s129 = sphi 0, %s128
      %s143 = sphi 0, %s129
      %s147 = sphi 0, %s147
      %s149 = sphi 0, %s147
      %s150 = sphi 0, %s149
      %s164 = sphi 0, %s150
      %s168 = sphi 0, %s168
      %s170 = sphi 0, %s168
      %s171 = sphi 0, %s170
      %s185 = sphi 0, %s171
      %s189 = sphi 0, %s189
      %s191 = sphi 0, %s189
      %s192 = sphi 0, %s191
      %s206 = sphi 0, %s192
      %s214 = sphi 0, %s216
      %s217 = sphi 0, %s214
      %s218 = sphi 0, %s217
      %s234 = sphi 0, %s218
    $region4: #{tpu_custom_call.1} parent=1 // loop_header_branch
      %27 = sbr.rel (%p25) target = $region8
    $region5: #{tpu_custom_call.1} parent=1 // loop_body
      %s29 = ssub.s32 %s24, 1
      %s30 = ssub.s32 %s24, 2
      %s37 = sadd.s32 1, %s32
      %p38 = scmp.ge.s32.totalorder %s37, 2
      %s39 = scalar_select %p38, 0, %s37
      %s40 = sadd.s32 1, %s31
      %s41 = scalar_select %p38, %s40, %s31
      %p42 = scmp.ge.s32.totalorder %s41, 2
      %s43 = scalar_select %p42, 0, %s41
      %s44 = ssub.s32 %s31, %s43
      %p45 = scmp.eq.s32.totalorder %s44, 0
      %s47 = sadd.s32 %s46, 1
      %s48 = scalar_select %p45, %s46, %s47
      %p51 = pneg %p45
      %p52 = scmp.eq.s32.totalorder %s24, 3
      %p53 = por %p51, %p52
      %p54 = scmp.ne.s32.totalorder %s46, %s49
      %p55 = scmp.eq.s32.totalorder %s24, 0
      %p56 = por %p54, %p55
      %p57 = scmp.ne.s32.totalorder %s46, %s49
      %p58 = scmp.eq.s32.totalorder %s29, 3
      %p59 = por %p57, %p58
      %p60 = scmp.ne.s32.totalorder %s49, %s50
      %p61 = scmp.eq.s32.totalorder %s29, 0
      %p62 = por %p60, %p61
      %p63 = scmp.ne.s32.totalorder %s49, %s50
      %p64 = scmp.eq.s32.totalorder %s30, 3
      %p65 = por %p63, %p64
      %p67 = scmp.ne.s32.totalorder %s50, %s66
      %p68 = scmp.eq.s32.totalorder %s30, 0
      %p69 = por %p67, %p68
      %s70 = ssub.s32 %s31, %s43
      %s71 = ssub.s32 %s32, %s39
      %s72 = sor.u32 %s70, %s71
      %p73 = scmp.eq.s32.totalorder %s72, 0
      %s75 = sadd.s32 %s74, 1
      %s76 = scalar_select %p73, %s74, %s75
      %p79 = pneg %p73
      %p80 = scmp.eq.s32.totalorder %s24, 3
      %p81 = por %p79, %p80
      %p82 = scmp.ne.s32.totalorder %s74, %s77
      %p83 = scmp.eq.s32.totalorder %s24, 0
      %p84 = por %p82, %p83
      %p85 = scmp.ne.s32.totalorder %s74, %s77
      %p86 = scmp.eq.s32.totalorder %s29, 3
      %p87 = por %p85, %p86
      %p88 = scmp.ne.s32.totalorder %s77, %s78
      %p89 = scmp.eq.s32.totalorder %s29, 0
      %p90 = por %p88, %p89
      %p91 = scmp.ne.s32.totalorder %s77, %s78
      %p92 = scmp.eq.s32.totalorder %s30, 3
      %p93 = por %p91, %p92
      %p95 = scmp.ne.s32.totalorder %s78, %s94
      %p96 = scmp.eq.s32.totalorder %s30, 0
      %p97 = por %p95, %p96
      %s98 = ssub.s32 %s31, %s43
      %s99 = ssub.s32 %s32, %s39
      %s100 = sor.u32 %s98, %s99
      %p101 = scmp.eq.s32.totalorder %s100, 0
      %s103 = sadd.s32 %s102, 1
      %s104 = scalar_select %p101, %s102, %s103
      %p107 = pneg %p101
      %p108 = scmp.eq.s32.totalorder %s24, 3
      %p109 = por %p107, %p108
      %p110 = scmp.ne.s32.totalorder %s102, %s105
      %p111 = scmp.eq.s32.totalorder %s24, 0
      %p112 = por %p110, %p111
      %p113 = scmp.ne.s32.totalorder %s102, %s105
      %p114 = scmp.eq.s32.totalorder %s29, 3
      %p115 = por %p113, %p114
      %p116 = scmp.ne.s32.totalorder %s105, %s106
      %p117 = scmp.eq.s32.totalorder %s29, 0
      %p118 = por %p116, %p117
      %p119 = scmp.ne.s32.totalorder %s105, %s106
      %p120 = scmp.eq.s32.totalorder %s30, 3
      %p121 = por %p119, %p120
      %p123 = scmp.ne.s32.totalorder %s106, %s122
      %p124 = scmp.eq.s32.totalorder %s30, 0
      %p125 = por %p123, %p124
      %s127 = sadd.s32 %s126, 1
      %p130 = scmp.eq.s32.totalorder %s24, 3
      %p131 = scmp.ne.s32.totalorder %s126, %s128
      %p132 = scmp.eq.s32.totalorder %s24, 0
      %p133 = por %p131, %p132
      %p134 = scmp.ne.s32.totalorder %s126, %s128
      %p135 = scmp.eq.s32.totalorder %s29, 3
      %p136 = por %p134, %p135
      %p137 = scmp.ne.s32.totalorder %s128, %s129
      %p138 = scmp.eq.s32.totalorder %s29, 0
      %p139 = por %p137, %p138
      %p140 = scmp.ne.s32.totalorder %s128, %s129
      %p141 = scmp.eq.s32.totalorder %s30, 3
      %p142 = por %p140, %p141
      %p144 = scmp.ne.s32.totalorder %s129, %s143
      %p145 = scmp.eq.s32.totalorder %s30, 0
      %p146 = por %p144, %p145
      %s148 = sadd.s32 %s147, 1
      %p151 = scmp.eq.s32.totalorder %s24, 3
      %p152 = scmp.ne.s32.totalorder %s147, %s149
      %p153 = scmp.eq.s32.totalorder %s24, 0
      %p154 = por %p152, %p153
      %p155 = scmp.ne.s32.totalorder %s147, %s149
      %p156 = scmp.eq.s32.totalorder %s29, 3
      %p157 = por %p155, %p156
      %p158 = scmp.ne.s32.totalorder %s149, %s150
      %p159 = scmp.eq.s32.totalorder %s29, 0
      %p160 = por %p158, %p159
      %p161 = scmp.ne.s32.totalorder %s149, %s150
      %p162 = scmp.eq.s32.totalorder %s30, 3
      %p163 = por %p161, %p162
      %p165 = scmp.ne.s32.totalorder %s150, %s164
      %p166 = scmp.eq.s32.totalorder %s30, 0
      %p167 = por %p165, %p166
      %s169 = sadd.s32 %s168, 1
      %p172 = scmp.eq.s32.totalorder %s24, 3
      %p173 = scmp.ne.s32.totalorder %s168, %s170
      %p174 = scmp.eq.s32.totalorder %s24, 0
      %p175 = por %p173, %p174
      %p176 = scmp.ne.s32.totalorder %s168, %s170
      %p177 = scmp.eq.s32.totalorder %s29, 3
      %p178 = por %p176, %p177
      %p179 = scmp.ne.s32.totalorder %s170, %s171
      %p180 = scmp.eq.s32.totalorder %s29, 0
      %p181 = por %p179, %p180
      %p182 = scmp.ne.s32.totalorder %s170, %s171
      %p183 = scmp.eq.s32.totalorder %s30, 3
      %p184 = por %p182, %p183
      %p186 = scmp.ne.s32.totalorder %s171, %s185
      %p187 = scmp.eq.s32.totalorder %s30, 0
      %p188 = por %p186, %p187
      %s190 = sadd.s32 %s189, 1
      %p193 = scmp.eq.s32.totalorder %s24, 3
      %p194 = scmp.ne.s32.totalorder %s189, %s191
      %p195 = scmp.eq.s32.totalorder %s24, 0
      %p196 = por %p194, %p195
      %p197 = scmp.ne.s32.totalorder %s189, %s191
      %p198 = scmp.eq.s32.totalorder %s29, 3
      %p199 = por %p197, %p198
      %p200 = scmp.ne.s32.totalorder %s191, %s192
      %p201 = scmp.eq.s32.totalorder %s29, 0
      %p202 = por %p200, %p201
      %p203 = scmp.ne.s32.totalorder %s191, %s192
      %p204 = scmp.eq.s32.totalorder %s30, 3
      %p205 = por %p203, %p204
      %p207 = scmp.ne.s32.totalorder %s192, %s206
      %p208 = scmp.eq.s32.totalorder %s30, 0
      %p209 = por %p207, %p208
      %s210 = ssub.s32 %s31, %s43
      %s211 = ssub.s32 %s32, %s39
      %s212 = sor.u32 %s210, %s211
      %p213 = scmp.eq.s32.totalorder %s212, 0
      %s215 = sadd.s32 %s214, 1
      %s216 = scalar_select %p213, %s214, %s215
      %p219 = pneg %p213
      %p220 = scmp.eq.s32.totalorder %s24, 3
      %p221 = por %p219, %p220
      %p222 = scmp.ne.s32.totalorder %s214, %s217
      %p223 = scmp.eq.s32.totalorder %s24, 0
      %p224 = por %p222, %p223
      %p225 = scmp.ne.s32.totalorder %s214, %s217
      %p226 = scmp.eq.s32.totalorder %s29, 3
      %p227 = por %p225, %p226
      %p228 = scmp.ne.s32.totalorder %s217, %s218
      %p229 = scmp.eq.s32.totalorder %s29, 0
      %p230 = por %p228, %p229
      %p231 = scmp.ne.s32.totalorder %s217, %s218
      %p232 = scmp.eq.s32.totalorder %s30, 3
      %p233 = por %p231, %p232
      %p235 = scmp.ne.s32.totalorder %s218, %s234
      %p236 = scmp.eq.s32.totalorder %s30, 0
      %p237 = por %p235, %p236
      %p238 = scmp.le.s32.totalorder 1, %s24
      %p239 = scmp.lt.s32.totalorder %s24, 5
      %p240 = pnand %p238, %p239
      %p241 = pneg %p240
      // Predicated region
      $region9: #{tpu_custom_call.1} parent=5 // pred_check
        _
      $region10: #{tpu_custom_call.1} parent=5 // pred_check_branch
        %243 = sbr.rel (%p240) target = $region12
      $region11: #{tpu_custom_call.1} parent=5 // pred_region
        %s244 = ssub.s32 %s24, 1
        // Predicated region
        $region13: #{tpu_custom_call.1} parent=11 // pred_check
          %p245 = pneg %p139
        $region14: #{tpu_custom_call.1} parent=11 // pred_check_branch
          %247 = sbr.rel (%p245) target = $region16
        $region15: #{tpu_custom_call.1} parent=11 // pred_region
          %s249 = ssub.s32 512, 512
          %250 = vsyncadd [#allocation10], %s249
          %s251 = sshll.u32 [#allocation9], 4
          %s252 = int_to_ptr.vmem [resolvable:$true] %s251
          %257 = dma.hbm_to_vmem [thread:$0]  %s3, 512, %s252, [#allocation10], 128, 128, 8
        $region16: #{tpu_custom_call.1} parent=11 // pred_fallthru
          _
        // Predicated region
        $region17: #{tpu_custom_call.1} parent=11 // pred_check
          %p258 = pneg %p160
        $region18: #{tpu_custom_call.1} parent=11 // pred_check_branch
          %260 = sbr.rel (%p258) target = $region20
        $region19: #{tpu_custom_call.1} parent=11 // pred_region
          %s262 = ssub.s32 512, 512
          %263 = vsyncadd [#allocation10], %s262
          %s264 = sshll.u32 [#allocation11], 4
          %s265 = int_to_ptr.vmem [resolvable:$true] %s264
          %270 = dma.hbm_to_vmem [thread:$0]  %s4, 512, %s265, [#allocation10], 128, 128, 8
        $region20: #{tpu_custom_call.1} parent=11 // pred_fallthru
          _
        // Predicated region
        $region21: #{tpu_custom_call.1} parent=11 // pred_check
          %p271 = pneg %p181
        $region22: #{tpu_custom_call.1} parent=11 // pred_check_branch
          %273 = sbr.rel (%p271) target = $region24
        $region23: #{tpu_custom_call.1} parent=11 // pred_region
          %s275 = ssub.s32 512, 512
          %276 = vsyncadd [#allocation13], %s275
          %s277 = sshll.u32 [#allocation12], 4
          %s278 = int_to_ptr.vmem [resolvable:$true] %s277
          %283 = dma.hbm_to_vmem [thread:$0]  %s5, 512, %s278, [#allocation13], 128, 128, 8
        $region24: #{tpu_custom_call.1} parent=11 // pred_fallthru
          _
        // Predicated region
        $region25: #{tpu_custom_call.1} parent=11 // pred_check
          %p284 = pneg %p202
        $region26: #{tpu_custom_call.1} parent=11 // pred_check_branch
          %286 = sbr.rel (%p284) target = $region28
        $region27: #{tpu_custom_call.1} parent=11 // pred_region
          %s288 = ssub.s32 512, 512
          %289 = vsyncadd [#allocation13], %s288
          %s290 = sshll.u32 [#allocation14], 4
          %s291 = int_to_ptr.vmem [resolvable:$true] %s290
          %296 = dma.hbm_to_vmem [thread:$0]  %s6, 512, %s291, [#allocation13], 128, 128, 8
        $region28: #{tpu_custom_call.1} parent=11 // pred_fallthru
          _
      $region12: #{tpu_custom_call.1} parent=5 // pred_fallthru
        _
      %p297 = scmp.lt.s32.totalorder %s24, 4
      // Predicated region
      $region29: #{tpu_custom_call.1} parent=5 // pred_check
        %p298 = pneg %p297
      $region30: #{tpu_custom_call.1} parent=5 // pred_check_branch
        %300 = sbr.rel (%p298) target = $region32
      $region31: #{tpu_custom_call.1} parent=5 // pred_region
        // Predicated region
        $region33: #{tpu_custom_call.1} parent=31 // pred_check
          %p301 = pneg %p56
        $region34: #{tpu_custom_call.1} parent=31 // pred_check_branch
          %303 = sbr.rel (%p301) target = $region36
        $region35: #{tpu_custom_call.1} parent=31 // pred_region
          %s304 = sand.u32 %s46, 1
          %s305 = scalar_lea.sflag [#allocation4], %s304
          %s306 = sand.u32 %s46, 1
          %s307 = smul.addr %s306, 8
          %s308 = scalar_lea.vmem [#allocation3], %s307
          %s310 = ssub.s32 128, 128
          %311 = vsyncadd %s305, %s310
          %s312 = smul.addr %s31, 128
          %s313 = scalar_lea.hbm %s0, %s312
          %s315 = sshll.u32 %s308, 4
          %s316 = int_to_ptr.vmem [resolvable:$true] %s315
          %318 = dma.hbm_to_vmem [thread:$0]  %s313, 128, %s316, %s305
        $region36: #{tpu_custom_call.1} parent=31 // pred_fallthru
          _
        // Predicated region
        $region37: #{tpu_custom_call.1} parent=31 // pred_check
          %p319 = pneg %p84
        $region38: #{tpu_custom_call.1} parent=31 // pred_check_branch
          %321 = sbr.rel (%p319) target = $region40
        $region39: #{tpu_custom_call.1} parent=31 // pred_region
          %s322 = sand.u32 %s24, 1
          %s323 = scalar_lea.sflag [#allocation7], %s322
          %s324 = sand.u32 %s74, 1
          %s325 = smul.addr %s324, 8
          %s326 = scalar_lea.vmem [#allocation6], %s325
          %s328 = ssub.s32 128, 128
          %329 = vsyncadd %s323, %s328
          %s330 = smul.addr %s31, 2
          %s331 = sadd.s32 %s32, %s330
          %s332 = smul.addr %s331, 128
          %s333 = scalar_lea.hbm %s1, %s332
          %s335 = sshll.u32 %s326, 4
          %s336 = int_to_ptr.vmem [resolvable:$true] %s335
          %338 = dma.hbm_to_vmem [thread:$0]  %s333, 128, %s336, %s323
        $region40: #{tpu_custom_call.1} parent=31 // pred_fallthru
          _
        // Predicated region
        $region41: #{tpu_custom_call.1} parent=31 // pred_check
          %p339 = pneg %p112
        $region42: #{tpu_custom_call.1} parent=31 // pred_check_branch
          %341 = sbr.rel (%p339) target = $region44
        $region43: #{tpu_custom_call.1} parent=31 // pred_region
          %s342 = sand.u32 %s24, 1
          %s343 = scalar_lea.sflag [#allocation7], %s342
          %s344 = sand.u32 %s102, 1
          %s345 = scalar_lea.vmem [#allocation8], %s344
          %s347 = ssub.s32 16, 16
          %348 = vsyncadd %s343, %s347
          %s349 = smul.addr %s31, 2
          %s350 = sadd.s32 %s32, %s349
          %s351 = smul.addr %s350, 16
          %s352 = scalar_lea.hbm %s2, %s351
          %s354 = sshll.u32 %s345, 4
          %s355 = int_to_ptr.vmem [resolvable:$true] %s354
          %357 = dma.hbm_to_vmem [thread:$0]  %s352, 16, %s355, %s343
        $region44: #{tpu_custom_call.1} parent=31 // pred_fallthru
          _
      $region32: #{tpu_custom_call.1} parent=5 // pred_fallthru
        _
      %p358 = scmp.le.s32.totalorder 1, %s24
      %p359 = scmp.lt.s32.totalorder %s24, 5
      %p360 = pnand %p358, %p359
      %p361 = pneg %p360
      // Predicated region
      $region45: #{tpu_custom_call.1} parent=5 // pred_check
        _
      $region46: #{tpu_custom_call.1} parent=5 // pred_check_branch
        %363 = sbr.rel (%p360) target = $region48
      $region47: #{tpu_custom_call.1} parent=5 // pred_region
        %s364 = ssub.s32 %s24, 1
        %s365 = sand.u32 %s49, 1
        %s366 = scalar_lea.sflag [#allocation4], %s365
        %s367 = sand.u32 %s49, 1
        %s368 = smul.addr %s367, 8
        %s369 = scalar_lea.vmem [#allocation3], %s368
        // Predicated region
        $region49: #{tpu_custom_call.1} parent=47 // pred_check
          %p370 = pneg %p62
        $region50: #{tpu_custom_call.1} parent=47 // pred_check_branch
          %372 = sbr.rel (%p370) target = $region52
        $region51: #{tpu_custom_call.1} parent=47 // pred_region
          %373 = dma.done %s366, 128
        $region52: #{tpu_custom_call.1} parent=47 // pred_fallthru
          _
        %s374 = sand.u32 %s29, 1
        %s375 = scalar_lea.sflag [#allocation7], %s374
        %s376 = sand.u32 %s77, 1
        %s377 = smul.addr %s376, 8
        %s378 = scalar_lea.vmem [#allocation6], %s377
        // Predicated region
        $region53: #{tpu_custom_call.1} parent=47 // pred_check
          %p379 = pneg %p90
        $region54: #{tpu_custom_call.1} parent=47 // pred_check_branch
          %381 = sbr.rel (%p379) target = $region56
        $region55: #{tpu_custom_call.1} parent=47 // pred_region
          %382 = dma.done %s375, 128
        $region56: #{tpu_custom_call.1} parent=47 // pred_fallthru
          _
        %s383 = sand.u32 %s29, 1
        %s384 = scalar_lea.sflag [#allocation7], %s383
        %s385 = sand.u32 %s105, 1
        %s386 = scalar_lea.vmem [#allocation8], %s385
        // Predicated region
        $region57: #{tpu_custom_call.1} parent=47 // pred_check
          %p387 = pneg %p118
        $region58: #{tpu_custom_call.1} parent=47 // pred_check_branch
          %389 = sbr.rel (%p387) target = $region60
        $region59: #{tpu_custom_call.1} parent=47 // pred_region
          %390 = dma.done %s384, 16
        $region60: #{tpu_custom_call.1} parent=47 // pred_fallthru
          _
        // Predicated region
        $region61: #{tpu_custom_call.1} parent=47 // pred_check
          %p391 = pneg %p139
        $region62: #{tpu_custom_call.1} parent=47 // pred_check_branch
          %393 = sbr.rel (%p391) target = $region64
        $region63: #{tpu_custom_call.1} parent=47 // pred_region
          %394 = dma.done [#allocation10], 512
        $region64: #{tpu_custom_call.1} parent=47 // pred_fallthru
          _
        // Predicated region
        $region65: #{tpu_custom_call.1} parent=47 // pred_check
          %p395 = pneg %p160
        $region66: #{tpu_custom_call.1} parent=47 // pred_check_branch
          %397 = sbr.rel (%p395) target = $region68
        $region67: #{tpu_custom_call.1} parent=47 // pred_region
          %398 = dma.done [#allocation10], 512
        $region68: #{tpu_custom_call.1} parent=47 // pred_fallthru
          _
        // Predicated region
        $region69: #{tpu_custom_call.1} parent=47 // pred_check
          %p399 = pneg %p181
        $region70: #{tpu_custom_call.1} parent=47 // pred_check_branch
          %401 = sbr.rel (%p399) target = $region72
        $region71: #{tpu_custom_call.1} parent=47 // pred_region
          %402 = dma.done [#allocation13], 512
        $region72: #{tpu_custom_call.1} parent=47 // pred_fallthru
          _
        // Predicated region
        $region73: #{tpu_custom_call.1} parent=47 // pred_check
          %p403 = pneg %p202
        $region74: #{tpu_custom_call.1} parent=47 // pred_check_branch
          %405 = sbr.rel (%p403) target = $region76
        $region75: #{tpu_custom_call.1} parent=47 // pred_region
          %406 = dma.done [#allocation13], 512
        $region76: #{tpu_custom_call.1} parent=47 // pred_fallthru
          _
        %s407 = sand.u32 %s49, 1
        %s408 = scalar_lea.sflag [#allocation4], %s407
        %s409 = sand.u32 %s49, 1
        %s410 = smul.addr %s409, 8
        %s411 = scalar_lea.vmem [#allocation3], %s410
        %p412 = pneg %p62
        %p413 = pneg %p59
        %s414 = sand.u32 %s29, 1
        %s415 = scalar_lea.sflag [#allocation7], %s414
        %s416 = sand.u32 %s77, 1
        %s417 = smul.addr %s416, 8
        %s418 = scalar_lea.vmem [#allocation6], %s417
        %p419 = pneg %p90
        %p420 = pneg %p87
        %s421 = sand.u32 %s29, 1
        %s422 = scalar_lea.sflag [#allocation7], %s421
        %s423 = sand.u32 %s105, 1
        %s424 = scalar_lea.vmem [#allocation8], %s423
        %p425 = pneg %p118
        %p426 = pneg %p115
        %p427 = pneg %p139
        %p428 = pneg %p136
        %p429 = pneg %p160
        %p430 = pneg %p157
        %p431 = pneg %p181
        %p432 = pneg %p178
        %p433 = pneg %p202
        %p434 = pneg %p199
        %p435 = pneg %p230
        %p436 = pneg %p227
        %s437 = sand.u32 %s217, 1
        %s438 = scalar_lea.sflag [#allocation5], %s437
        %s439 = sand.u32 %s217, 1
        %s440 = smul.addr %s439, 8
        %s441 = scalar_lea.vmem [#allocation15], %s440
        %p442 = scmp.eq.s32.totalorder %s34, 0
        // Predicated region
        $region77: #{tpu_custom_call.1} parent=47 // pred_check
          %p443 = pneg %p442
        $region78: #{tpu_custom_call.1} parent=47 // pred_check_branch
          %445 = sbr.rel (%p443) target = $region80
        $region79: #{tpu_custom_call.1} parent=47 // pred_region
          %v446 = vld [vmem:[%s369] sm:$0xff]
          %v447 = vld [vmem:[#allocation9] sm:$0xff]
          %v448 = vld [vmem:[#allocation9 + $0x8] sm:$0xff]
          %v449 = vld [vmem:[#allocation9 + $0x10] sm:$0xff]
          %v450 = vld [vmem:[#allocation9 + $0x18] sm:$0xff]
          %vm451 = vcmask 261120
          %v453 = vsel %vm451, %v446, 0
          %v456 = vsel %vm451, %v447, 0
          %v459 = vsel %vm451, %v448, 0
          %v462 = vsel %vm451, %v449, 0
          %v465 = vsel %vm451, %v450, 0
          %467 = vmatprep.subr.mxu0 0.0
          %468 = vmatpush1.xpose.msra.mxu0 0.0
          %469 = vmatprep.subr.mxu0 0.0
          %470 = vmatpush1.xpose.msra.mxu0 0.0
          %471 = vmatprep.subr.mxu0 0.0
          %472 = vmatpush1.xpose.msra.mxu0 0.0
          %473 = vmatprep.subr.mxu0 0.0
          %474 = vmatpush1.xpose.msra.mxu0 0.0
          %475 = vmatprep.subr.mxu0 0.0
          %476 = vmatpush1.xpose.msra.mxu0 0.0
          %477 = vmatprep.subr.mxu0 0.0
          %478 = vmatpush1.xpose.msra.mxu0 0.0
          %479 = vmatprep.subr.mxu0 0.0
          %480 = vmatpush1.xpose.msra.mxu0 0.0
          %481 = vmatprep.subr.mxu0 0.0
          %482 = vmatpush1.xpose.msra.mxu0 0.0
          %483 = vmatprep.subr.mxu0 0.0
          %484 = vmatpush1.xpose.msra.mxu0 0.0
          %485 = vmatprep.subr.mxu0 0.0
          %486 = vmatpush1.xpose.msra.mxu0 0.0
          %487 = vmatprep.subr.mxu0 0.0
          %488 = vmatpush1.xpose.msra.mxu0 0.0
          %489 = vmatprep.subr.mxu0 0.0
          %490 = vmatpush1.xpose.msra.mxu0 0.0
          %491 = vmatprep.subr.mxu0 0.0
          %492 = vmatpush1.xpose.msra.mxu0 %v465
          %493 = vmatprep.subr.mxu0 0.0
          %494 = vmatpush1.xpose.msra.mxu0 %v462
          %495 = vmatprep.subr.mxu0 0.0
          %496 = vmatpush1.xpose.msra.mxu0 %v459
          %497 = vmatprep.subr.mxu0 0.0
          %498 = vmatpush1.xpose.msra.mxu0 %v456
          %499 = vmatprep.subr.mxu0 0.0
          %500 = vmatpush2.xpose.msra.mxu0 0.0
          %501 = vmatprep.subr.mxu0 0.0
          %502 = vmatpush2.xpose.msra.mxu0 0.0
          %503 = vmatprep.subr.mxu0 0.0
          %504 = vmatpush2.xpose.msra.mxu0 0.0
          %505 = vmatprep.subr.mxu0 0.0
          %506 = vmatpush2.xpose.msra.mxu0 0.0
          %507 = vmatprep.subr.mxu0 0.0
          %508 = vmatpush2.xpose.msra.mxu0 0.0
          %509 = vmatprep.subr.mxu0 0.0
          %510 = vmatpush2.xpose.msra.mxu0 0.0
          %511 = vmatprep.subr.mxu0 0.0
          %512 = vmatpush2.xpose.msra.mxu0 0.0
          %513 = vmatprep.subr.mxu0 0.0
          %514 = vmatpush2.xpose.msra.mxu0 0.0
          %515 = vmatprep.subr.mxu0 0.0
          %516 = vmatpush2.xpose.msra.mxu0 0.0
          %517 = vmatprep.subr.mxu0 0.0
          %518 = vmatpush2.xpose.msra.mxu0 0.0
          %519 = vmatprep.subr.mxu0 0.0
          %520 = vmatpush2.xpose.msra.mxu0 0.0
          %521 = vmatprep.subr.mxu0 0.0
          %522 = vmatpush2.xpose.msra.mxu0 0.0
          %523 = vmatprep.subr.mxu0 0.0
          %524 = vmatpush2.xpose.msra.mxu0 0.0
          %525 = vmatprep.subr.mxu0 0.0
          %526 = vmatpush2.xpose.msra.mxu0 0.0
          %527 = vmatprep.subr.mxu0 0.0
          %528 = vmatpush2.xpose.msra.mxu0 0.0
          %529 = vmatprep.subr.mxu0 0.0
          %530 = vmatpush2.xpose.msra.mxu0 0.0
          %531 = vmatprep.mubr.f32.mxu0 0.0
          %532 = vmatmul.mubr.f32.gmra.mxu0 %v453
          %v533 = vpop.f32.mrf.mxu0
          %v534 = vadd.f32 0.0, %v533
          %v535 = vpop.f32.mrf.mxu0
          %536 = vdwg.mxu0
          %v537 = vmul.f32 %v534, 0.35355338
          %538 = vst.msk [vmem:[#allocation2] sm:$0xff] %vm451, %v537
        $region80: #{tpu_custom_call.1} parent=47 // pred_fallthru
          _
        %v539 = vld [vmem:[#allocation2] sm:$0xff]
        %v540 = vld [vmem:[%s378] sm:$0xff]
        %v541 = vld [vmem:[#allocation11] sm:$0xff]
        %v542 = vld [vmem:[#allocation11 + $0x8] sm:$0xff]
        %v543 = vld [vmem:[#allocation11 + $0x10] sm:$0xff]
        %v544 = vld [vmem:[#allocation11 + $0x18] sm:$0xff]
        %v545 = vld [vmem:[#allocation12] sm:$0xff]
        %v546 = vld [vmem:[#allocation12 + $0x8] sm:$0xff]
        %v547 = vld [vmem:[#allocation12 + $0x10] sm:$0xff]
        %v548 = vld [vmem:[#allocation12 + $0x18] sm:$0xff]
        %v549 = vld [vmem:[#allocation14] sm:$0xff]
        %v550 = vld [vmem:[#allocation14 + $0x8] sm:$0xff]
        %v551 = vld [vmem:[#allocation14 + $0x10] sm:$0xff]
        %v552 = vld [vmem:[#allocation14 + $0x18] sm:$0xff]
        %v553 = vld [vmem:[%s386] sm:$0x1]
        %vm554 = vcmask 261120
        %v556 = vsel %vm554, %v540, 0
        %v559 = vsel %vm554, %v541, 0
        %v562 = vsel %vm554, %v542, 0
        %v565 = vsel %vm554, %v543, 0
        %v568 = vsel %vm554, %v544, 0
        %570 = vmatprep.subr.mxu0 0.0
        %571 = vmatpush1.xpose.msra.mxu0 0.0
        %572 = vmatprep.subr.mxu0 0.0
        %573 = vmatpush1.xpose.msra.mxu0 0.0
        %574 = vmatprep.subr.mxu0 0.0
        %575 = vmatpush1.xpose.msra.mxu0 0.0
        %576 = vmatprep.subr.mxu0 0.0
        %577 = vmatpush1.xpose.msra.mxu0 0.0
        %578 = vmatprep.subr.mxu0 0.0
        %579 = vmatpush1.xpose.msra.mxu0 0.0
        %580 = vmatprep.subr.mxu0 0.0
        %581 = vmatpush1.xpose.msra.mxu0 0.0
        %582 = vmatprep.subr.mxu0 0.0
        %583 = vmatpush1.xpose.msra.mxu0 0.0
        %584 = vmatprep.subr.mxu0 0.0
        %585 = vmatpush1.xpose.msra.mxu0 0.0
        %586 = vmatprep.subr.mxu0 0.0
        %587 = vmatpush1.xpose.msra.mxu0 0.0
        %588 = vmatprep.subr.mxu0 0.0
        %589 = vmatpush1.xpose.msra.mxu0 0.0
        %590 = vmatprep.subr.mxu0 0.0
        %591 = vmatpush1.xpose.msra.mxu0 0.0
        %592 = vmatprep.subr.mxu0 0.0
        %593 = vmatpush1.xpose.msra.mxu0 0.0
        %594 = vmatprep.subr.mxu0 0.0
        %595 = vmatpush1.xpose.msra.mxu0 %v568
        %596 = vmatprep.subr.mxu0 0.0
        %597 = vmatpush1.xpose.msra.mxu0 %v565
        %598 = vmatprep.subr.mxu0 0.0
        %599 = vmatpush1.xpose.msra.mxu0 %v562
        %600 = vmatprep.subr.mxu0 0.0
        %601 = vmatpush1.xpose.msra.mxu0 %v559
        %602 = vmatprep.subr.mxu0 0.0
        %603 = vmatpush2.xpose.msra.mxu0 0.0
        %604 = vmatprep.subr.mxu0 0.0
        %605 = vmatpush2.xpose.msra.mxu0 0.0
        %606 = vmatprep.subr.mxu0 0.0
        %607 = vmatpush2.xpose.msra.mxu0 0.0
        %608 = vmatprep.subr.mxu0 0.0
        %609 = vmatpush2.xpose.msra.mxu0 0.0
        %610 = vmatprep.subr.mxu0 0.0
        %611 = vmatpush2.xpose.msra.mxu0 0.0
        %612 = vmatprep.subr.mxu0 0.0
        %613 = vmatpush2.xpose.msra.mxu0 0.0
        %614 = vmatprep.subr.mxu0 0.0
        %615 = vmatpush2.xpose.msra.mxu0 0.0
        %616 = vmatprep.subr.mxu0 0.0
        %617 = vmatpush2.xpose.msra.mxu0 0.0
        %618 = vmatprep.subr.mxu0 0.0
        %619 = vmatpush2.xpose.msra.mxu0 0.0
        %620 = vmatprep.subr.mxu0 0.0
        %621 = vmatpush2.xpose.msra.mxu0 0.0
        %622 = vmatprep.subr.mxu0 0.0
        %623 = vmatpush2.xpose.msra.mxu0 0.0
        %624 = vmatprep.subr.mxu0 0.0
        %625 = vmatpush2.xpose.msra.mxu0 0.0
        %626 = vmatprep.subr.mxu0 0.0
        %627 = vmatpush2.xpose.msra.mxu0 0.0
        %628 = vmatprep.subr.mxu0 0.0
        %629 = vmatpush2.xpose.msra.mxu0 0.0
        %630 = vmatprep.subr.mxu0 0.0
        %631 = vmatpush2.xpose.msra.mxu0 0.0
        %632 = vmatprep.subr.mxu0 0.0
        %633 = vmatpush2.xpose.msra.mxu0 0.0
        %634 = vmatprep.mubr.f32.mxu0 0.0
        %635 = vmatmul.mubr.f32.gmra.mxu0 %v556
        %v636 = vpop.f32.mrf.mxu0
        %v637 = vadd.f32 0.0, %v636
        %v638 = vpop.f32.mrf.mxu0
        %639 = vdwg.mxu0
        %v641 = vsel %vm554, %v545, 0
        %v644 = vsel %vm554, %v546, 0
        %v647 = vsel %vm554, %v547, 0
        %v650 = vsel %vm554, %v548, 0
        %652 = vmatprep.subr.mxu0 0.0
        %653 = vmatpush1.xpose.msra.mxu0 0.0
        %654 = vmatprep.subr.mxu0 0.0
        %655 = vmatpush1.xpose.msra.mxu0 0.0
        %656 = vmatprep.subr.mxu0 0.0
        %657 = vmatpush1.xpose.msra.mxu0 0.0
        %658 = vmatprep.subr.mxu0 0.0
        %659 = vmatpush1.xpose.msra.mxu0 0.0
        %660 = vmatprep.subr.mxu0 0.0
        %661 = vmatpush1.xpose.msra.mxu0 0.0
        %662 = vmatprep.subr.mxu0 0.0
        %663 = vmatpush1.xpose.msra.mxu0 0.0
        %664 = vmatprep.subr.mxu0 0.0
        %665 = vmatpush1.xpose.msra.mxu0 0.0
        %666 = vmatprep.subr.mxu0 0.0
        %667 = vmatpush1.xpose.msra.mxu0 0.0
        %668 = vmatprep.subr.mxu0 0.0
        %669 = vmatpush1.xpose.msra.mxu0 0.0
        %670 = vmatprep.subr.mxu0 0.0
        %671 = vmatpush1.xpose.msra.mxu0 0.0
        %672 = vmatprep.subr.mxu0 0.0
        %673 = vmatpush1.xpose.msra.mxu0 0.0
        %674 = vmatprep.subr.mxu0 0.0
        %675 = vmatpush1.xpose.msra.mxu0 0.0
        %676 = vmatprep.subr.mxu0 0.0
        %677 = vmatpush1.xpose.msra.mxu0 %v650
        %678 = vmatprep.subr.mxu0 0.0
        %679 = vmatpush1.xpose.msra.mxu0 %v647
        %680 = vmatprep.subr.mxu0 0.0
        %681 = vmatpush1.xpose.msra.mxu0 %v644
        %682 = vmatprep.subr.mxu0 0.0
        %683 = vmatpush1.xpose.msra.mxu0 %v641
        %684 = vmatprep.subr.mxu0 0.0
        %685 = vmatpush2.xpose.msra.mxu0 0.0
        %686 = vmatprep.subr.mxu0 0.0
        %687 = vmatpush2.xpose.msra.mxu0 0.0
        %688 = vmatprep.subr.mxu0 0.0
        %689 = vmatpush2.xpose.msra.mxu0 0.0
        %690 = vmatprep.subr.mxu0 0.0
        %691 = vmatpush2.xpose.msra.mxu0 0.0
        %692 = vmatprep.subr.mxu0 0.0
        %693 = vmatpush2.xpose.msra.mxu0 0.0
        %694 = vmatprep.subr.mxu0 0.0
        %695 = vmatpush2.xpose.msra.mxu0 0.0
        %696 = vmatprep.subr.mxu0 0.0
        %697 = vmatpush2.xpose.msra.mxu0 0.0
        %698 = vmatprep.subr.mxu0 0.0
        %699 = vmatpush2.xpose.msra.mxu0 0.0
        %700 = vmatprep.subr.mxu0 0.0
        %701 = vmatpush2.xpose.msra.mxu0 0.0
        %702 = vmatprep.subr.mxu0 0.0
        %703 = vmatpush2.xpose.msra.mxu0 0.0
        %704 = vmatprep.subr.mxu0 0.0
        %705 = vmatpush2.xpose.msra.mxu0 0.0
        %706 = vmatprep.subr.mxu0 0.0
        %707 = vmatpush2.xpose.msra.mxu0 0.0
        %708 = vmatprep.subr.mxu0 0.0
        %709 = vmatpush2.xpose.msra.mxu0 0.0
        %710 = vmatprep.subr.mxu0 0.0
        %711 = vmatpush2.xpose.msra.mxu0 0.0
        %712 = vmatprep.subr.mxu0 0.0
        %713 = vmatpush2.xpose.msra.mxu0 0.0
        %714 = vmatprep.subr.mxu0 0.0
        %715 = vmatpush2.xpose.msra.mxu0 0.0
        %716 = vmatprep.mubr.f32.mxu0 0.0
        %717 = vmatmul.mubr.f32.gmra.mxu0 %v556
        %v718 = vpop.f32.mrf.mxu0
        %v719 = vadd.f32 0.0, %v718
        %v720 = vpop.f32.mrf.mxu0
        %721 = vdwg.mxu0
        %v722 = vsub.f32 1.0, %v553
        %v723 = vmul.f32 %v722, -3.4028235e+38
        %v725 = vlaneseq
        %v726 = vshrl.u32 %v725, 7
        %v727 = vsub.s32 0, %v726
        %v728 = vrot.slane %v723, %v727
        %vm730 = vcmask 64512
        %v732 = vsel %vm730, %v539, 0
        %v735 = vsel %vm730, %v637, 0
        %737 = vmatprep.subr.mxu0 0.0
        %738 = vmatpush1.xpose.msra.mxu0 0.0
        %739 = vmatprep.subr.mxu0 0.0
        %740 = vmatpush1.xpose.msra.mxu0 0.0
        %741 = vmatprep.subr.mxu0 0.0
        %742 = vmatpush1.xpose.msra.mxu0 0.0
        %743 = vmatprep.subr.mxu0 0.0
        %744 = vmatpush1.xpose.msra.mxu0 0.0
        %745 = vmatprep.subr.mxu0 0.0
        %746 = vmatpush1.xpose.msra.mxu0 0.0
        %747 = vmatprep.subr.mxu0 0.0
        %748 = vmatpush1.xpose.msra.mxu0 0.0
        %749 = vmatprep.subr.mxu0 0.0
        %750 = vmatpush1.xpose.msra.mxu0 0.0
        %751 = vmatprep.subr.mxu0 0.0
        %752 = vmatpush1.xpose.msra.mxu0 0.0
        %753 = vmatprep.subr.mxu0 0.0
        %754 = vmatpush1.xpose.msra.mxu0 0.0
        %755 = vmatprep.subr.mxu0 0.0
        %756 = vmatpush1.xpose.msra.mxu0 0.0
        %757 = vmatprep.subr.mxu0 0.0
        %758 = vmatpush1.xpose.msra.mxu0 0.0
        %759 = vmatprep.subr.mxu0 0.0
        %760 = vmatpush1.xpose.msra.mxu0 0.0
        %761 = vmatprep.subr.mxu0 0.0
        %762 = vmatpush1.xpose.msra.mxu0 0.0
        %763 = vmatprep.subr.mxu0 0.0
        %764 = vmatpush1.xpose.msra.mxu0 0.0
        %765 = vmatprep.subr.mxu0 0.0
        %766 = vmatpush1.xpose.msra.mxu0 0.0
        %767 = vmatprep.subr.mxu0 0.0
        %768 = vmatpush1.xpose.msra.mxu0 %v735
        %769 = vmatprep.subr.mxu0 0.0
        %770 = vmatpush2.xpose.msra.mxu0 0.0
        %771 = vmatprep.subr.mxu0 0.0
        %772 = vmatpush2.xpose.msra.mxu0 0.0
        %773 = vmatprep.subr.mxu0 0.0
        %774 = vmatpush2.xpose.msra.mxu0 0.0
        %775 = vmatprep.subr.mxu0 0.0
        %776 = vmatpush2.xpose.msra.mxu0 0.0
        %777 = vmatprep.subr.mxu0 0.0
        %778 = vmatpush2.xpose.msra.mxu0 0.0
        %779 = vmatprep.subr.mxu0 0.0
        %780 = vmatpush2.xpose.msra.mxu0 0.0
        %781 = vmatprep.subr.mxu0 0.0
        %782 = vmatpush2.xpose.msra.mxu0 0.0
        %783 = vmatprep.subr.mxu0 0.0
        %784 = vmatpush2.xpose.msra.mxu0 0.0
        %785 = vmatprep.subr.mxu0 0.0
        %786 = vmatpush2.xpose.msra.mxu0 0.0
        %787 = vmatprep.subr.mxu0 0.0
        %788 = vmatpush2.xpose.msra.mxu0 0.0
        %789 = vmatprep.subr.mxu0 0.0
        %790 = vmatpush2.xpose.msra.mxu0 0.0
        %791 = vmatprep.subr.mxu0 0.0
        %792 = vmatpush2.xpose.msra.mxu0 0.0
        %793 = vmatprep.subr.mxu0 0.0
        %794 = vmatpush2.xpose.msra.mxu0 0.0
        %795 = vmatprep.subr.mxu0 0.0
        %796 = vmatpush2.xpose.msra.mxu0 0.0
        %797 = vmatprep.subr.mxu0 0.0
        %798 = vmatpush2.xpose.msra.mxu0 0.0
        %799 = vmatprep.subr.mxu0 0.0
        %800 = vmatpush2.xpose.msra.mxu0 0.0
        %801 = vmatprep.mubr.f32.mxu0 0.0
        %802 = vmatmul.mubr.f32.gmra.mxu0 %v732
        %v803 = vpop.f32.mrf.mxu0
        %v804 = vadd.f32 %v728, %v803
        %v805 = vpop.f32.mrf.mxu0
        %806 = vdwg.mxu0
        %v807 = vsel %vm730, %v804, -inf
        %808 = vmax.xlane.f32.xlu0 %v807
        %v809 = vpop.xlane.xlu0 %808
        %v810 = vsub.f32 %v804, %v809
        %v811 = vmul.f32 %v810, 1.442695
        %v812 = vpow.pop %v811
        %v813 = vsel %vm730, %v812, 0.0
        %814 = vadd.xlane.f32.xlu0 %v813
        %v815 = vpop.xlane.xlu0 %814
        %v816 = vrcp.pop %v815
        %v817 = vmul.f32 %v812, %v816
        %v819 = vsel %vm730, %v817, 0
        %821 = vmatprep.subr.mxu0 0.0
        %822 = vmatpush1.msra.mxu0 0.0
        %823 = vmatprep.subr.mxu0 0.0
        %824 = vmatpush1.msra.mxu0 0.0
        %825 = vmatprep.subr.mxu0 0.0
        %826 = vmatpush1.msra.mxu0 0.0
        %827 = vmatprep.subr.mxu0 0.0
        %828 = vmatpush1.msra.mxu0 0.0
        %829 = vmatprep.subr.mxu0 0.0
        %830 = vmatpush1.msra.mxu0 0.0
        %831 = vmatprep.subr.mxu0 0.0
        %832 = vmatpush1.msra.mxu0 0.0
        %833 = vmatprep.subr.mxu0 0.0
        %834 = vmatpush1.msra.mxu0 0.0
        %835 = vmatprep.subr.mxu0 0.0
        %836 = vmatpush1.msra.mxu0 0.0
        %837 = vmatprep.subr.mxu0 0.0
        %838 = vmatpush1.msra.mxu0 0.0
        %839 = vmatprep.subr.mxu0 0.0
        %840 = vmatpush1.msra.mxu0 0.0
        %841 = vmatprep.subr.mxu0 0.0
        %842 = vmatpush1.msra.mxu0 0.0
        %843 = vmatprep.subr.mxu0 0.0
        %844 = vmatpush1.msra.mxu0 0.0
        %845 = vmatprep.subr.mxu0 0.0
        %846 = vmatpush1.msra.mxu0 0.0
        %847 = vmatprep.subr.mxu0 0.0
        %848 = vmatpush1.msra.mxu0 0.0
        %849 = vmatprep.subr.mxu0 0.0
        %850 = vmatpush1.msra.mxu0 0.0
        %851 = vmatprep.subr.mxu0 0.0
        %852 = vmatpush1.msra.mxu0 %v719
        %853 = vmatprep.subr.mxu0 0.0
        %854 = vmatpush2.msra.mxu0 0.0
        %855 = vmatprep.subr.mxu0 0.0
        %856 = vmatpush2.msra.mxu0 0.0
        %857 = vmatprep.subr.mxu0 0.0
        %858 = vmatpush2.msra.mxu0 0.0
        %859 = vmatprep.subr.mxu0 0.0
        %860 = vmatpush2.msra.mxu0 0.0
        %861 = vmatprep.subr.mxu0 0.0
        %862 = vmatpush2.msra.mxu0 0.0
        %863 = vmatprep.subr.mxu0 0.0
        %864 = vmatpush2.msra.mxu0 0.0
        %865 = vmatprep.subr.mxu0 0.0
        %866 = vmatpush2.msra.mxu0 0.0
        %867 = vmatprep.subr.mxu0 0.0
        %868 = vmatpush2.msra.mxu0 0.0
        %869 = vmatprep.subr.mxu0 0.0
        %870 = vmatpush2.msra.mxu0 0.0
        %871 = vmatprep.subr.mxu0 0.0
        %872 = vmatpush2.msra.mxu0 0.0
        %873 = vmatprep.subr.mxu0 0.0
        %874 = vmatpush2.msra.mxu0 0.0
        %875 = vmatprep.subr.mxu0 0.0
        %876 = vmatpush2.msra.mxu0 0.0
        %877 = vmatprep.subr.mxu0 0.0
        %878 = vmatpush2.msra.mxu0 0.0
        %879 = vmatprep.subr.mxu0 0.0
        %880 = vmatpush2.msra.mxu0 0.0
        %881 = vmatprep.subr.mxu0 0.0
        %882 = vmatpush2.msra.mxu0 0.0
        %883 = vmatprep.subr.mxu0 0.0
        %884 = vmatpush2.msra.mxu0 0.0
        %885 = vmatprep.mubr.f32.mxu0 0.0
        %886 = vmatmul.mubr.f32.gmra.mxu0 %v819
        %v887 = vpop.f32.mrf.mxu0
        %v888 = vadd.f32 0.0, %v887
        %v889 = vpop.f32.mrf.mxu0
        %890 = vdwg.mxu0
        %891 = vrot.lane.b32.xlu0 %v539, 120
        %v892 = vpop.permute.xlu0 %891
        %893 = vrot.lane.b32.xlu0 %v637, 120
        %v894 = vpop.permute.xlu0 %893
        %v895 = vsel %vm730, %v892, 0
        %v897 = vsel %vm730, %v894, 0
        %899 = vmatprep.subr.mxu0 0.0
        %900 = vmatpush1.xpose.msra.mxu0 0.0
        %901 = vmatprep.subr.mxu0 0.0
        %902 = vmatpush1.xpose.msra.mxu0 0.0
        %903 = vmatprep.subr.mxu0 0.0
        %904 = vmatpush1.xpose.msra.mxu0 0.0
        %905 = vmatprep.subr.mxu0 0.0
        %906 = vmatpush1.xpose.msra.mxu0 0.0
        %907 = vmatprep.subr.mxu0 0.0
        %908 = vmatpush1.xpose.msra.mxu0 0.0
        %909 = vmatprep.subr.mxu0 0.0
        %910 = vmatpush1.xpose.msra.mxu0 0.0
        %911 = vmatprep.subr.mxu0 0.0
        %912 = vmatpush1.xpose.msra.mxu0 0.0
        %913 = vmatprep.subr.mxu0 0.0
        %914 = vmatpush1.xpose.msra.mxu0 0.0
        %915 = vmatprep.subr.mxu0 0.0
        %916 = vmatpush1.xpose.msra.mxu0 0.0
        %917 = vmatprep.subr.mxu0 0.0
        %918 = vmatpush1.xpose.msra.mxu0 0.0
        %919 = vmatprep.subr.mxu0 0.0
        %920 = vmatpush1.xpose.msra.mxu0 0.0
        %921 = vmatprep.subr.mxu0 0.0
        %922 = vmatpush1.xpose.msra.mxu0 0.0
        %923 = vmatprep.subr.mxu0 0.0
        %924 = vmatpush1.xpose.msra.mxu0 0.0
        %925 = vmatprep.subr.mxu0 0.0
        %926 = vmatpush1.xpose.msra.mxu0 0.0
        %927 = vmatprep.subr.mxu0 0.0
        %928 = vmatpush1.xpose.msra.mxu0 0.0
        %929 = vmatprep.subr.mxu0 0.0
        %930 = vmatpush1.xpose.msra.mxu0 %v897
        %931 = vmatprep.subr.mxu0 0.0
        %932 = vmatpush2.xpose.msra.mxu0 0.0
        %933 = vmatprep.subr.mxu0 0.0
        %934 = vmatpush2.xpose.msra.mxu0 0.0
        %935 = vmatprep.subr.mxu0 0.0
        %936 = vmatpush2.xpose.msra.mxu0 0.0
        %937 = vmatprep.subr.mxu0 0.0
        %938 = vmatpush2.xpose.msra.mxu0 0.0
        %939 = vmatprep.subr.mxu0 0.0
        %940 = vmatpush2.xpose.msra.mxu0 0.0
        %941 = vmatprep.subr.mxu0 0.0
        %942 = vmatpush2.xpose.msra.mxu0 0.0
        %943 = vmatprep.subr.mxu0 0.0
        %944 = vmatpush2.xpose.msra.mxu0 0.0
        %945 = vmatprep.subr.mxu0 0.0
        %946 = vmatpush2.xpose.msra.mxu0 0.0
        %947 = vmatprep.subr.mxu0 0.0
        %948 = vmatpush2.xpose.msra.mxu0 0.0
        %949 = vmatprep.subr.mxu0 0.0
        %950 = vmatpush2.xpose.msra.mxu0 0.0
        %951 = vmatprep.subr.mxu0 0.0
        %952 = vmatpush2.xpose.msra.mxu0 0.0
        %953 = vmatprep.subr.mxu0 0.0
        %954 = vmatpush2.xpose.msra.mxu0 0.0
        %955 = vmatprep.subr.mxu0 0.0
        %956 = vmatpush2.xpose.msra.mxu0 0.0
        %957 = vmatprep.subr.mxu0 0.0
        %958 = vmatpush2.xpose.msra.mxu0 0.0
        %959 = vmatprep.subr.mxu0 0.0
        %960 = vmatpush2.xpose.msra.mxu0 0.0
        %961 = vmatprep.subr.mxu0 0.0
        %962 = vmatpush2.xpose.msra.mxu0 0.0
        %963 = vmatprep.mubr.f32.mxu0 0.0
        %964 = vmatmul.mubr.f32.gmra.mxu0 %v895
        %v965 = vpop.f32.mrf.mxu0
        %v966 = vadd.f32 %v728, %v965
        %v967 = vpop.f32.mrf.mxu0
        %968 = vdwg.mxu0
        %v969 = vsel %vm730, %v966, -inf
        %970 = vmax.xlane.f32.xlu0 %v969
        %v971 = vpop.xlane.xlu0 %970
        %v972 = vsub.f32 %v966, %v971
        %v973 = vmul.f32 %v972, 1.442695
        %v974 = vpow.pop %v973
        %v975 = vsel %vm730, %v974, 0.0
        %976 = vadd.xlane.f32.xlu0 %v975
        %v977 = vpop.xlane.xlu0 %976
        %v978 = vrcp.pop %v977
        %v979 = vmul.f32 %v974, %v978
        %981 = vrot.lane.b32.xlu0 %v719, 120
        %v982 = vpop.permute.xlu0 %981
        %v985 = vsel %vm730, %v979, 0
        %987 = vmatprep.subr.mxu0 0.0
        %988 = vmatpush1.msra.mxu0 0.0
        %989 = vmatprep.subr.mxu0 0.0
        %990 = vmatpush1.msra.mxu0 0.0
        %991 = vmatprep.subr.mxu0 0.0
        %992 = vmatpush1.msra.mxu0 0.0
        %993 = vmatprep.subr.mxu0 0.0
        %994 = vmatpush1.msra.mxu0 0.0
        %995 = vmatprep.subr.mxu0 0.0
        %996 = vmatpush1.msra.mxu0 0.0
        %997 = vmatprep.subr.mxu0 0.0
        %998 = vmatpush1.msra.mxu0 0.0
        %999 = vmatprep.subr.mxu0 0.0
        %1000 = vmatpush1.msra.mxu0 0.0
        %1001 = vmatprep.subr.mxu0 0.0
        %1002 = vmatpush1.msra.mxu0 0.0
        %1003 = vmatprep.subr.mxu0 0.0
        %1004 = vmatpush1.msra.mxu0 0.0
        %1005 = vmatprep.subr.mxu0 0.0
        %1006 = vmatpush1.msra.mxu0 0.0
        %1007 = vmatprep.subr.mxu0 0.0
        %1008 = vmatpush1.msra.mxu0 0.0
        %1009 = vmatprep.subr.mxu0 0.0
        %1010 = vmatpush1.msra.mxu0 0.0
        %1011 = vmatprep.subr.mxu0 0.0
        %1012 = vmatpush1.msra.mxu0 0.0
        %1013 = vmatprep.subr.mxu0 0.0
        %1014 = vmatpush1.msra.mxu0 0.0
        %1015 = vmatprep.subr.mxu0 0.0
        %1016 = vmatpush1.msra.mxu0 0.0
        %1017 = vmatprep.subr.mxu0 0.0
        %1018 = vmatpush1.msra.mxu0 %v982
        %1019 = vmatprep.subr.mxu0 0.0
        %1020 = vmatpush2.msra.mxu0 0.0
        %1021 = vmatprep.subr.mxu0 0.0
        %1022 = vmatpush2.msra.mxu0 0.0
        %1023 = vmatprep.subr.mxu0 0.0
        %1024 = vmatpush2.msra.mxu0 0.0
        %1025 = vmatprep.subr.mxu0 0.0
        %1026 = vmatpush2.msra.mxu0 0.0
        %1027 = vmatprep.subr.mxu0 0.0
        %1028 = vmatpush2.msra.mxu0 0.0
        %1029 = vmatprep.subr.mxu0 0.0
        %1030 = vmatpush2.msra.mxu0 0.0
        %1031 = vmatprep.subr.mxu0 0.0
        %1032 = vmatpush2.msra.mxu0 0.0
        %1033 = vmatprep.subr.mxu0 0.0
        %1034 = vmatpush2.msra.mxu0 0.0
        %1035 = vmatprep.subr.mxu0 0.0
        %1036 = vmatpush2.msra.mxu0 0.0
        %1037 = vmatprep.subr.mxu0 0.0
        %1038 = vmatpush2.msra.mxu0 0.0
        %1039 = vmatprep.subr.mxu0 0.0
        %1040 = vmatpush2.msra.mxu0 0.0
        %1041 = vmatprep.subr.mxu0 0.0
        %1042 = vmatpush2.msra.mxu0 0.0
        %1043 = vmatprep.subr.mxu0 0.0
        %1044 = vmatpush2.msra.mxu0 0.0
        %1045 = vmatprep.subr.mxu0 0.0
        %1046 = vmatpush2.msra.mxu0 0.0
        %1047 = vmatprep.subr.mxu0 0.0
        %1048 = vmatpush2.msra.mxu0 0.0
        %1049 = vmatprep.subr.mxu0 0.0
        %1050 = vmatpush2.msra.mxu0 0.0
        %1051 = vmatprep.mubr.f32.mxu0 0.0
        %1052 = vmatmul.mubr.f32.gmra.mxu0 %v985
        %v1053 = vpop.f32.mrf.mxu0
        %v1054 = vadd.f32 0.0, %v1053
        %v1055 = vpop.f32.mrf.mxu0
        %1056 = vdwg.mxu0
        %1057 = vrot.lane.b32.xlu0 %v539, 112
        %v1058 = vpop.permute.xlu0 %1057
        %1059 = vrot.lane.b32.xlu0 %v637, 112
        %v1060 = vpop.permute.xlu0 %1059
        %v1061 = vsel %vm730, %v1058, 0
        %v1063 = vsel %vm730, %v1060, 0
        %1065 = vmatprep.subr.mxu0 0.0
        %1066 = vmatpush1.xpose.msra.mxu0 0.0
        %1067 = vmatprep.subr.mxu0 0.0
        %1068 = vmatpush1.xpose.msra.mxu0 0.0
        %1069 = vmatprep.subr.mxu0 0.0
        %1070 = vmatpush1.xpose.msra.mxu0 0.0
        %1071 = vmatprep.subr.mxu0 0.0
        %1072 = vmatpush1.xpose.msra.mxu0 0.0
        %1073 = vmatprep.subr.mxu0 0.0
        %1074 = vmatpush1.xpose.msra.mxu0 0.0
        %1075 = vmatprep.subr.mxu0 0.0
        %1076 = vmatpush1.xpose.msra.mxu0 0.0
        %1077 = vmatprep.subr.mxu0 0.0
        %1078 = vmatpush1.xpose.msra.mxu0 0.0
        %1079 = vmatprep.subr.mxu0 0.0
        %1080 = vmatpush1.xpose.msra.mxu0 0.0
        %1081 = vmatprep.subr.mxu0 0.0
        %1082 = vmatpush1.xpose.msra.mxu0 0.0
        %1083 = vmatprep.subr.mxu0 0.0
        %1084 = vmatpush1.xpose.msra.mxu0 0.0
        %1085 = vmatprep.subr.mxu0 0.0
        %1086 = vmatpush1.xpose.msra.mxu0 0.0
        %1087 = vmatprep.subr.mxu0 0.0
        %1088 = vmatpush1.xpose.msra.mxu0 0.0
        %1089 = vmatprep.subr.mxu0 0.0
        %1090 = vmatpush1.xpose.msra.mxu0 0.0
        %1091 = vmatprep.subr.mxu0 0.0
        %1092 = vmatpush1.xpose.msra.mxu0 0.0
        %1093 = vmatprep.subr.mxu0 0.0
        %1094 = vmatpush1.xpose.msra.mxu0 0.0
        %1095 = vmatprep.subr.mxu0 0.0
        %1096 = vmatpush1.xpose.msra.mxu0 %v1063
        %1097 = vmatprep.subr.mxu0 0.0
        %1098 = vmatpush2.xpose.msra.mxu0 0.0
        %1099 = vmatprep.subr.mxu0 0.0
        %1100 = vmatpush2.xpose.msra.mxu0 0.0
        %1101 = vmatprep.subr.mxu0 0.0
        %1102 = vmatpush2.xpose.msra.mxu0 0.0
        %1103 = vmatprep.subr.mxu0 0.0
        %1104 = vmatpush2.xpose.msra.mxu0 0.0
        %1105 = vmatprep.subr.mxu0 0.0
        %1106 = vmatpush2.xpose.msra.mxu0 0.0
        %1107 = vmatprep.subr.mxu0 0.0
        %1108 = vmatpush2.xpose.msra.mxu0 0.0
        %1109 = vmatprep.subr.mxu0 0.0
        %1110 = vmatpush2.xpose.msra.mxu0 0.0
        %1111 = vmatprep.subr.mxu0 0.0
        %1112 = vmatpush2.xpose.msra.mxu0 0.0
        %1113 = vmatprep.subr.mxu0 0.0
        %1114 = vmatpush2.xpose.msra.mxu0 0.0
        %1115 = vmatprep.subr.mxu0 0.0
        %1116 = vmatpush2.xpose.msra.mxu0 0.0
        %1117 = vmatprep.subr.mxu0 0.0
        %1118 = vmatpush2.xpose.msra.mxu0 0.0
        %1119 = vmatprep.subr.mxu0 0.0
        %1120 = vmatpush2.xpose.msra.mxu0 0.0
        %1121 = vmatprep.subr.mxu0 0.0
        %1122 = vmatpush2.xpose.msra.mxu0 0.0
        %1123 = vmatprep.subr.mxu0 0.0
        %1124 = vmatpush2.xpose.msra.mxu0 0.0
        %1125 = vmatprep.subr.mxu0 0.0
        %1126 = vmatpush2.xpose.msra.mxu0 0.0
        %1127 = vmatprep.subr.mxu0 0.0
        %1128 = vmatpush2.xpose.msra.mxu0 0.0
        %1129 = vmatprep.mubr.f32.mxu0 0.0
        %1130 = vmatmul.mubr.f32.gmra.mxu0 %v1061
        %v1131 = vpop.f32.mrf.mxu0
        %v1132 = vadd.f32 %v728, %v1131
        %v1133 = vpop.f32.mrf.mxu0
        %1134 = vdwg.mxu0
        %v1135 = vsel %vm730, %v1132, -inf
        %1136 = vmax.xlane.f32.xlu0 %v1135
        %v1137 = vpop.xlane.xlu0 %1136
        %v1138 = vsub.f32 %v1132, %v1137
        %v1139 = vmul.f32 %v1138, 1.442695
        %v1140 = vpow.pop %v1139
        %v1141 = vsel %vm730, %v1140, 0.0
        %1142 = vadd.xlane.f32.xlu0 %v1141
        %v1143 = vpop.xlane.xlu0 %1142
        %v1144 = vrcp.pop %v1143
        %v1145 = vmul.f32 %v1140, %v1144
        %1146 = vrot.lane.b32.xlu0 %v719, 112
        %v1147 = vpop.permute.xlu0 %1146
        %v1150 = vsel %vm730, %v1145, 0
        %1152 = vmatprep.subr.mxu0 0.0
        %1153 = vmatpush1.msra.mxu0 0.0
        %1154 = vmatprep.subr.mxu0 0.0
        %1155 = vmatpush1.msra.mxu0 0.0
        %1156 = vmatprep.subr.mxu0 0.0
        %1157 = vmatpush1.msra.mxu0 0.0
        %1158 = vmatprep.subr.mxu0 0.0
        %1159 = vmatpush1.msra.mxu0 0.0
        %1160 = vmatprep.subr.mxu0 0.0
        %1161 = vmatpush1.msra.mxu0 0.0
        %1162 = vmatprep.subr.mxu0 0.0
        %1163 = vmatpush1.msra.mxu0 0.0
        %1164 = vmatprep.subr.mxu0 0.0
        %1165 = vmatpush1.msra.mxu0 0.0
        %1166 = vmatprep.subr.mxu0 0.0
        %1167 = vmatpush1.msra.mxu0 0.0
        %1168 = vmatprep.subr.mxu0 0.0
        %1169 = vmatpush1.msra.mxu0 0.0
        %1170 = vmatprep.subr.mxu0 0.0
        %1171 = vmatpush1.msra.mxu0 0.0
        %1172 = vmatprep.subr.mxu0 0.0
        %1173 = vmatpush1.msra.mxu0 0.0
        %1174 = vmatprep.subr.mxu0 0.0
        %1175 = vmatpush1.msra.mxu0 0.0
        %1176 = vmatprep.subr.mxu0 0.0
        %1177 = vmatpush1.msra.mxu0 0.0
        %1178 = vmatprep.subr.mxu0 0.0
        %1179 = vmatpush1.msra.mxu0 0.0
        %1180 = vmatprep.subr.mxu0 0.0
        %1181 = vmatpush1.msra.mxu0 0.0
        %1182 = vmatprep.subr.mxu0 0.0
        %1183 = vmatpush1.msra.mxu0 %v1147
        %1184 = vmatprep.subr.mxu0 0.0
        %1185 = vmatpush2.msra.mxu0 0.0
        %1186 = vmatprep.subr.mxu0 0.0
        %1187 = vmatpush2.msra.mxu0 0.0
        %1188 = vmatprep.subr.mxu0 0.0
        %1189 = vmatpush2.msra.mxu0 0.0
        %1190 = vmatprep.subr.mxu0 0.0
        %1191 = vmatpush2.msra.mxu0 0.0
        %1192 = vmatprep.subr.mxu0 0.0
        %1193 = vmatpush2.msra.mxu0 0.0
        %1194 = vmatprep.subr.mxu0 0.0
        %1195 = vmatpush2.msra.mxu0 0.0
        %1196 = vmatprep.subr.mxu0 0.0
        %1197 = vmatpush2.msra.mxu0 0.0
        %1198 = vmatprep.subr.mxu0 0.0
        %1199 = vmatpush2.msra.mxu0 0.0
        %1200 = vmatprep.subr.mxu0 0.0
        %1201 = vmatpush2.msra.mxu0 0.0
        %1202 = vmatprep.subr.mxu0 0.0
        %1203 = vmatpush2.msra.mxu0 0.0
        %1204 = vmatprep.subr.mxu0 0.0
        %1205 = vmatpush2.msra.mxu0 0.0
        %1206 = vmatprep.subr.mxu0 0.0
        %1207 = vmatpush2.msra.mxu0 0.0
        %1208 = vmatprep.subr.mxu0 0.0
        %1209 = vmatpush2.msra.mxu0 0.0
        %1210 = vmatprep.subr.mxu0 0.0
        %1211 = vmatpush2.msra.mxu0 0.0
        %1212 = vmatprep.subr.mxu0 0.0
        %1213 = vmatpush2.msra.mxu0 0.0
        %1214 = vmatprep.subr.mxu0 0.0
        %1215 = vmatpush2.msra.mxu0 0.0
        %1216 = vmatprep.mubr.f32.mxu0 0.0
        %1217 = vmatmul.mubr.f32.gmra.mxu0 %v1150
        %v1218 = vpop.f32.mrf.mxu0
        %v1219 = vadd.f32 0.0, %v1218
        %v1220 = vpop.f32.mrf.mxu0
        %1221 = vdwg.mxu0
        %1222 = vrot.lane.b32.xlu0 %v539, 104
        %v1223 = vpop.permute.xlu0 %1222
        %1224 = vrot.lane.b32.xlu0 %v637, 104
        %v1225 = vpop.permute.xlu0 %1224
        %v1226 = vsel %vm730, %v1223, 0
        %v1228 = vsel %vm730, %v1225, 0
        %1230 = vmatprep.subr.mxu0 0.0
        %1231 = vmatpush1.xpose.msra.mxu0 0.0
        %1232 = vmatprep.subr.mxu0 0.0
        %1233 = vmatpush1.xpose.msra.mxu0 0.0
        %1234 = vmatprep.subr.mxu0 0.0
        %1235 = vmatpush1.xpose.msra.mxu0 0.0
        %1236 = vmatprep.subr.mxu0 0.0
        %1237 = vmatpush1.xpose.msra.mxu0 0.0
        %1238 = vmatprep.subr.mxu0 0.0
        %1239 = vmatpush1.xpose.msra.mxu0 0.0
        %1240 = vmatprep.subr.mxu0 0.0
        %1241 = vmatpush1.xpose.msra.mxu0 0.0
        %1242 = vmatprep.subr.mxu0 0.0
        %1243 = vmatpush1.xpose.msra.mxu0 0.0
        %1244 = vmatprep.subr.mxu0 0.0
        %1245 = vmatpush1.xpose.msra.mxu0 0.0
        %1246 = vmatprep.subr.mxu0 0.0
        %1247 = vmatpush1.xpose.msra.mxu0 0.0
        %1248 = vmatprep.subr.mxu0 0.0
        %1249 = vmatpush1.xpose.msra.mxu0 0.0
        %1250 = vmatprep.subr.mxu0 0.0
        %1251 = vmatpush1.xpose.msra.mxu0 0.0
        %1252 = vmatprep.subr.mxu0 0.0
        %1253 = vmatpush1.xpose.msra.mxu0 0.0
        %1254 = vmatprep.subr.mxu0 0.0
        %1255 = vmatpush1.xpose.msra.mxu0 0.0
        %1256 = vmatprep.subr.mxu0 0.0
        %1257 = vmatpush1.xpose.msra.mxu0 0.0
        %1258 = vmatprep.subr.mxu0 0.0
        %1259 = vmatpush1.xpose.msra.mxu0 0.0
        %1260 = vmatprep.subr.mxu0 0.0
        %1261 = vmatpush1.xpose.msra.mxu0 %v1228
        %1262 = vmatprep.subr.mxu0 0.0
        %1263 = vmatpush2.xpose.msra.mxu0 0.0
        %1264 = vmatprep.subr.mxu0 0.0
        %1265 = vmatpush2.xpose.msra.mxu0 0.0
        %1266 = vmatprep.subr.mxu0 0.0
        %1267 = vmatpush2.xpose.msra.mxu0 0.0
        %1268 = vmatprep.subr.mxu0 0.0
        %1269 = vmatpush2.xpose.msra.mxu0 0.0
        %1270 = vmatprep.subr.mxu0 0.0
        %1271 = vmatpush2.xpose.msra.mxu0 0.0
        %1272 = vmatprep.subr.mxu0 0.0
        %1273 = vmatpush2.xpose.msra.mxu0 0.0
        %1274 = vmatprep.subr.mxu0 0.0
        %1275 = vmatpush2.xpose.msra.mxu0 0.0
        %1276 = vmatprep.subr.mxu0 0.0
        %1277 = vmatpush2.xpose.msra.mxu0 0.0
        %1278 = vmatprep.subr.mxu0 0.0
        %1279 = vmatpush2.xpose.msra.mxu0 0.0
        %1280 = vmatprep.subr.mxu0 0.0
        %1281 = vmatpush2.xpose.msra.mxu0 0.0
        %1282 = vmatprep.subr.mxu0 0.0
        %1283 = vmatpush2.xpose.msra.mxu0 0.0
        %1284 = vmatprep.subr.mxu0 0.0
        %1285 = vmatpush2.xpose.msra.mxu0 0.0
        %1286 = vmatprep.subr.mxu0 0.0
        %1287 = vmatpush2.xpose.msra.mxu0 0.0
        %1288 = vmatprep.subr.mxu0 0.0
        %1289 = vmatpush2.xpose.msra.mxu0 0.0
        %1290 = vmatprep.subr.mxu0 0.0
        %1291 = vmatpush2.xpose.msra.mxu0 0.0
        %1292 = vmatprep.subr.mxu0 0.0
        %1293 = vmatpush2.xpose.msra.mxu0 0.0
        %1294 = vmatprep.mubr.f32.mxu0 0.0
        %1295 = vmatmul.mubr.f32.gmra.mxu0 %v1226
        %v1296 = vpop.f32.mrf.mxu0
        %v1297 = vadd.f32 %v728, %v1296
        %v1298 = vpop.f32.mrf.mxu0
        %1299 = vdwg.mxu0
        %v1300 = vsel %vm730, %v1297, -inf
        %1301 = vmax.xlane.f32.xlu0 %v1300
        %v1302 = vpop.xlane.xlu0 %1301
        %v1303 = vsub.f32 %v1297, %v1302
        %v1304 = vmul.f32 %v1303, 1.442695
        %v1305 = vpow.pop %v1304
        %v1306 = vsel %vm730, %v1305, 0.0
        %1307 = vadd.xlane.f32.xlu0 %v1306
        %v1308 = vpop.xlane.xlu0 %1307
        %v1309 = vrcp.pop %v1308
        %v1310 = vmul.f32 %v1305, %v1309
        %1311 = vrot.lane.b32.xlu0 %v719, 104
        %v1312 = vpop.permute.xlu0 %1311
        %v1315 = vsel %vm730, %v1310, 0
        %1317 = vmatprep.subr.mxu0 0.0
        %1318 = vmatpush1.msra.mxu0 0.0
        %1319 = vmatprep.subr.mxu0 0.0
        %1320 = vmatpush1.msra.mxu0 0.0
        %1321 = vmatprep.subr.mxu0 0.0
        %1322 = vmatpush1.msra.mxu0 0.0
        %1323 = vmatprep.subr.mxu0 0.0
        %1324 = vmatpush1.msra.mxu0 0.0
        %1325 = vmatprep.subr.mxu0 0.0
        %1326 = vmatpush1.msra.mxu0 0.0
        %1327 = vmatprep.subr.mxu0 0.0
        %1328 = vmatpush1.msra.mxu0 0.0
        %1329 = vmatprep.subr.mxu0 0.0
        %1330 = vmatpush1.msra.mxu0 0.0
        %1331 = vmatprep.subr.mxu0 0.0
        %1332 = vmatpush1.msra.mxu0 0.0
        %1333 = vmatprep.subr.mxu0 0.0
        %1334 = vmatpush1.msra.mxu0 0.0
        %1335 = vmatprep.subr.mxu0 0.0
        %1336 = vmatpush1.msra.mxu0 0.0
        %1337 = vmatprep.subr.mxu0 0.0
        %1338 = vmatpush1.msra.mxu0 0.0
        %1339 = vmatprep.subr.mxu0 0.0
        %1340 = vmatpush1.msra.mxu0 0.0
        %1341 = vmatprep.subr.mxu0 0.0
        %1342 = vmatpush1.msra.mxu0 0.0
        %1343 = vmatprep.subr.mxu0 0.0
        %1344 = vmatpush1.msra.mxu0 0.0
        %1345 = vmatprep.subr.mxu0 0.0
        %1346 = vmatpush1.msra.mxu0 0.0
        %1347 = vmatprep.subr.mxu0 0.0
        %1348 = vmatpush1.msra.mxu0 %v1312
        %1349 = vmatprep.subr.mxu0 0.0
        %1350 = vmatpush2.msra.mxu0 0.0
        %1351 = vmatprep.subr.mxu0 0.0
        %1352 = vmatpush2.msra.mxu0 0.0
        %1353 = vmatprep.subr.mxu0 0.0
        %1354 = vmatpush2.msra.mxu0 0.0
        %1355 = vmatprep.subr.mxu0 0.0
        %1356 = vmatpush2.msra.mxu0 0.0
        %1357 = vmatprep.subr.mxu0 0.0
        %1358 = vmatpush2.msra.mxu0 0.0
        %1359 = vmatprep.subr.mxu0 0.0
        %1360 = vmatpush2.msra.mxu0 0.0
        %1361 = vmatprep.subr.mxu0 0.0
        %1362 = vmatpush2.msra.mxu0 0.0
        %1363 = vmatprep.subr.mxu0 0.0
        %1364 = vmatpush2.msra.mxu0 0.0
        %1365 = vmatprep.subr.mxu0 0.0
        %1366 = vmatpush2.msra.mxu0 0.0
        %1367 = vmatprep.subr.mxu0 0.0
        %1368 = vmatpush2.msra.mxu0 0.0
        %1369 = vmatprep.subr.mxu0 0.0
        %1370 = vmatpush2.msra.mxu0 0.0
        %1371 = vmatprep.subr.mxu0 0.0
        %1372 = vmatpush2.msra.mxu0 0.0
        %1373 = vmatprep.subr.mxu0 0.0
        %1374 = vmatpush2.msra.mxu0 0.0
        %1375 = vmatprep.subr.mxu0 0.0
        %1376 = vmatpush2.msra.mxu0 0.0
        %1377 = vmatprep.subr.mxu0 0.0
        %1378 = vmatpush2.msra.mxu0 0.0
        %1379 = vmatprep.subr.mxu0 0.0
        %1380 = vmatpush2.msra.mxu0 0.0
        %1381 = vmatprep.mubr.f32.mxu0 0.0
        %1382 = vmatmul.mubr.f32.gmra.mxu0 %v1315
        %v1383 = vpop.f32.mrf.mxu0
        %v1384 = vadd.f32 0.0, %v1383
        %v1385 = vpop.f32.mrf.mxu0
        %1386 = vdwg.mxu0
        %1388 = vrot.lane.b32.xlu0 %v1054, 8
        %v1389 = vpop.permute.xlu0 %1388
        %1392 = vrot.lane.b32.xlu0 %v1219, 16
        %v1393 = vpop.permute.xlu0 %1392
        %1396 = vrot.lane.b32.xlu0 %v1384, 24
        %v1397 = vpop.permute.xlu0 %1396
        %v1399 = vsel %vm730, %v888, %v1389
        %vm1400 = vcmask 130048
        %v1401 = vsel %vm1400, %v1399, %v1393
        %vm1402 = vcmask 195584
        %v1403 = vsel %vm1402, %v1401, %v1397
        %v1405 = vsel %vm554, %v1403, 0
        %v1408 = vsel %vm554, %v549, 0
        %v1411 = vsel %vm554, %v550, 0
        %v1414 = vsel %vm554, %v551, 0
        %v1417 = vsel %vm554, %v552, 0
        %1419 = vmatprep.subr.mxu0 0.0
        %1420 = vmatpush1.xpose.msra.mxu0 0.0
        %1421 = vmatprep.subr.mxu0 0.0
        %1422 = vmatpush1.xpose.msra.mxu0 0.0
        %1423 = vmatprep.subr.mxu0 0.0
        %1424 = vmatpush1.xpose.msra.mxu0 0.0
        %1425 = vmatprep.subr.mxu0 0.0
        %1426 = vmatpush1.xpose.msra.mxu0 0.0
        %1427 = vmatprep.subr.mxu0 0.0
        %1428 = vmatpush1.xpose.msra.mxu0 0.0
        %1429 = vmatprep.subr.mxu0 0.0
        %1430 = vmatpush1.xpose.msra.mxu0 0.0
        %1431 = vmatprep.subr.mxu0 0.0
        %1432 = vmatpush1.xpose.msra.mxu0 0.0
        %1433 = vmatprep.subr.mxu0 0.0
        %1434 = vmatpush1.xpose.msra.mxu0 0.0
        %1435 = vmatprep.subr.mxu0 0.0
        %1436 = vmatpush1.xpose.msra.mxu0 0.0
        %1437 = vmatprep.subr.mxu0 0.0
        %1438 = vmatpush1.xpose.msra.mxu0 0.0
        %1439 = vmatprep.subr.mxu0 0.0
        %1440 = vmatpush1.xpose.msra.mxu0 0.0
        %1441 = vmatprep.subr.mxu0 0.0
        %1442 = vmatpush1.xpose.msra.mxu0 0.0
        %1443 = vmatprep.subr.mxu0 0.0
        %1444 = vmatpush1.xpose.msra.mxu0 %v1417
        %1445 = vmatprep.subr.mxu0 0.0
        %1446 = vmatpush1.xpose.msra.mxu0 %v1414
        %1447 = vmatprep.subr.mxu0 0.0
        %1448 = vmatpush1.xpose.msra.mxu0 %v1411
        %1449 = vmatprep.subr.mxu0 0.0
        %1450 = vmatpush1.xpose.msra.mxu0 %v1408
        %1451 = vmatprep.subr.mxu0 0.0
        %1452 = vmatpush2.xpose.msra.mxu0 0.0
        %1453 = vmatprep.subr.mxu0 0.0
        %1454 = vmatpush2.xpose.msra.mxu0 0.0
        %1455 = vmatprep.subr.mxu0 0.0
        %1456 = vmatpush2.xpose.msra.mxu0 0.0
        %1457 = vmatprep.subr.mxu0 0.0
        %1458 = vmatpush2.xpose.msra.mxu0 0.0
        %1459 = vmatprep.subr.mxu0 0.0
        %1460 = vmatpush2.xpose.msra.mxu0 0.0
        %1461 = vmatprep.subr.mxu0 0.0
        %1462 = vmatpush2.xpose.msra.mxu0 0.0
        %1463 = vmatprep.subr.mxu0 0.0
        %1464 = vmatpush2.xpose.msra.mxu0 0.0
        %1465 = vmatprep.subr.mxu0 0.0
        %1466 = vmatpush2.xpose.msra.mxu0 0.0
        %1467 = vmatprep.subr.mxu0 0.0
        %1468 = vmatpush2.xpose.msra.mxu0 0.0
        %1469 = vmatprep.subr.mxu0 0.0
        %1470 = vmatpush2.xpose.msra.mxu0 0.0
        %1471 = vmatprep.subr.mxu0 0.0
        %1472 = vmatpush2.xpose.msra.mxu0 0.0
        %1473 = vmatprep.subr.mxu0 0.0
        %1474 = vmatpush2.xpose.msra.mxu0 0.0
        %1475 = vmatprep.subr.mxu0 0.0
        %1476 = vmatpush2.xpose.msra.mxu0 0.0
        %1477 = vmatprep.subr.mxu0 0.0
        %1478 = vmatpush2.xpose.msra.mxu0 0.0
        %1479 = vmatprep.subr.mxu0 0.0
        %1480 = vmatpush2.xpose.msra.mxu0 0.0
        %1481 = vmatprep.subr.mxu0 0.0
        %1482 = vmatpush2.xpose.msra.mxu0 0.0
        %1483 = vmatprep.mubr.f32.mxu0 0.0
        %1484 = vmatmul.mubr.f32.gmra.mxu0 %v1405
        %v1485 = vpop.f32.mrf.mxu0
        %v1486 = vadd.f32 0.0, %v1485
        %v1487 = vpop.f32.mrf.mxu0
        %1488 = vdwg.mxu0
        %1489 = vst.msk [vmem:[%s441] sm:$0xff] %vm554, %v1486
        %s1490 = sand.u32 %s217, 1
        %s1491 = scalar_lea.sflag [#allocation5], %s1490
        %s1492 = sand.u32 %s217, 1
        %s1493 = smul.addr %s1492, 8
        %s1494 = scalar_lea.vmem [#allocation15], %s1493
        // Predicated region
        $region81: #{tpu_custom_call.1} parent=47 // pred_check
          %p1495 = pneg %p227
        $region82: #{tpu_custom_call.1} parent=47 // pred_check_branch
          %1497 = sbr.rel (%p1495) target = $region84
        $region83: #{tpu_custom_call.1} parent=47 // pred_region
          %s1499 = ssub.s32 128, 128
          %1500 = vsyncadd %s1491, %s1499
          %s1501 = smul.addr %s33, 2
          %s1502 = sadd.s32 %s34, %s1501
          %s1503 = smul.addr %s1502, 128
          %s1504 = scalar_lea.hbm %s7, %s1503
          %s1506 = sshll.u32 %s1494, 4
          %s1507 = int_to_ptr.vmem [resolvable:$true] %s1506
          %1509 = dma.vmem_to_hbm [thread:$0]  %s1507, 128, %s1504, %s1491
        $region84: #{tpu_custom_call.1} parent=47 // pred_fallthru
          _
      $region48: #{tpu_custom_call.1} parent=5 // pred_fallthru
        _
      %p1510 = scmp.le.s32.totalorder 2, %s24
      // Predicated region
      $region85: #{tpu_custom_call.1} parent=5 // pred_check
        %p1511 = pneg %p1510
      $region86: #{tpu_custom_call.1} parent=5 // pred_check_branch
        %1513 = sbr.rel (%p1511) target = $region88
      $region87: #{tpu_custom_call.1} parent=5 // pred_region
        %s1514 = ssub.s32 %s24, 2
        // Predicated region
        $region89: #{tpu_custom_call.1} parent=87 // pred_check
          %p1515 = pneg %p233
        $region90: #{tpu_custom_call.1} parent=87 // pred_check_branch
          %1517 = sbr.rel (%p1515) target = $region92
        $region91: #{tpu_custom_call.1} parent=87 // pred_region
          %s1518 = sand.u32 %s218, 1
          %s1519 = scalar_lea.sflag [#allocation5], %s1518
          %s1520 = sand.u32 %s218, 1
          %s1521 = smul.addr %s1520, 8
          %s1522 = scalar_lea.vmem [#allocation15], %s1521
          %1523 = dma.done %s1519, 128
        $region92: #{tpu_custom_call.1} parent=87 // pred_fallthru
          _
      $region88: #{tpu_custom_call.1} parent=5 // pred_fallthru
        _
    $region6: #{tpu_custom_call.1} parent=1 // loop_footer
      %s28 = sadd.s32 1, %s24
    $region7: #{tpu_custom_call.1} parent=1 // loop_footer_branch
      %23 = sbr.rel target = $region3
    $region8: #{tpu_custom_call.1} parent=1 // loop_exit
      _
    %1524 = vsyncpa [#allocation4], 1
    %s1525 = scalar_lea.sflag [#allocation4], 1
    %1526 = vsyncpa %s1525, 1
    %1527 = vsyncpa [#allocation7], 1
    %s1528 = scalar_lea.sflag [#allocation7], 1
    %1529 = vsyncpa %s1528, 1
    %1530 = vsyncpa [#allocation10], 1
    %1531 = vsyncpa [#allocation13], 1
    %1532 = vsyncpa [#allocation5], 1
    %s1533 = scalar_lea.sflag [#allocation5], 1
    %1534 = vsyncpa %s1533, 1

</llo_original>
